<compile_context>
chip_gen: v7x
topology: tpu7x:2x2x1
jax: 0.10.0
libtpu: 0.0.40
codegen_flags: <defaults>
</compile_context>

<pallas_src>
import functools

import jax
import jax.numpy as jnp
from jax.experimental import pallas as pl
from jax.experimental.pallas import tpu as pltpu

LANE = 128


def lsn_kernel(pooled_ref, wp_ref, w_fused_ref, wsub_s_ref, wt_s_ref, bias_ref,
               out_ref, *, f_pad, s_pad, sub_pad):
    # merged bias row, sliced at 128-lane boundaries (free views)
    bp = bias_ref[:, :f_pad]
    bs = bias_ref[:, f_pad:f_pad + s_pad]
    bsub = bias_ref[:, f_pad + s_pad:f_pad + s_pad + sub_pad]
    bt = bias_ref[:, f_pad + s_pad + sub_pad:]

    pooled = pooled_ref[...]                                   # bf16 [tb, C_pad]

    # ---- backbone-stub projection C -> F (bf16 MXU, f32 accumulate) ----
    feats_f32 = jnp.dot(pooled, wp_ref[...],
                        preferred_element_type=jnp.float32) + bp          # [tb, F_pad]
    feats = feats_f32.astype(jnp.bfloat16)

    # ---- one wide matmul for all three feats-consuming layers ----
    # columns: [0:S) fc_super | [S:S+Sub) fc_sub feats-part | [S+Sub:) fc_target feats-part
    fused = jnp.dot(feats, w_fused_ref[...],
                    preferred_element_type=jnp.float32)                   # [tb, S+Sub+T]

    super_logits = fused[:, :s_pad] + bs                                  # [tb, S_pad]

    # ---- sequential small matmuls stay f32 (parity with torch f32 path) ----
    sub_logits = (fused[:, s_pad:s_pad + sub_pad]
                  + jnp.dot(super_logits, wsub_s_ref[...],
                            preferred_element_type=jnp.float32)
                  + bsub)                                                 # [tb, Sub_pad]

    target_logits = (fused[:, s_pad + sub_pad:]
                     + jnp.dot(sub_logits, wt_s_ref[...],
                               preferred_element_type=jnp.float32)
                     + bt)                                                # [tb, T_pad]

    # single merged output block; all stores land on 128-lane boundaries
    out_ref[:, :s_pad] = super_logits
    out_ref[:, s_pad:s_pad + sub_pad] = sub_logits
    out_ref[:, s_pad + sub_pad:] = target_logits


def logit_sharing_forward(x, params, *, batch_tile=None):
    """x: [B, C, H, W] float32 (NCHW). params: (wp, bp, ws, bs, wsub, bsub, wt, bt)
    in PyTorch nn.Linear layout: wp [F, C], ws [S, F], wsub [Sub, F+S], wt [T, F+Sub]."""
    B, C, H, W = x.shape
    wp, bp, ws, bs, wsub, bsub, wt, bt = params
    F = wp.shape[0]
    S, Sub, T = ws.shape[0], wsub.shape[0], wt.shape[0]
    assert ws.shape[1] == F and wsub.shape[1] == F + S and wt.shape[1] == F + Sub

    rup = lambda n, m: ((n + m - 1) // m) * m
    C_pad, F_pad = rup(C, LANE), rup(F, LANE)
    S_pad, Sub_pad, T_pad = rup(S, LANE), rup(Sub, LANE), rup(T, LANE)
    N_out = S_pad + Sub_pad + T_pad

    # ---- backbone stub part 1: global average pool in plain JAX (not in-kernel) ----
    pooled = jnp.mean(x.astype(jnp.float32), axis=(2, 3))                 # [B, C]

    # ---- batch tiling: one step for small B, 256-row tiles (>=2 steps) for large B ----
    if batch_tile is None:
        b16 = rup(B, 16)                       # bf16 packs 16 sublanes per vreg
        batch_tile = b16 if b16 <= 256 else 256
    tb = batch_tile
    B_pad = rup(max(B, tb), tb)
    grid = (B_pad // tb,)

    def pad2(a, r, c):
        return jnp.pad(a, ((0, r - a.shape[0]), (0, c - a.shape[1])))

    # input tile pre-cast to bf16 (halves input DMA bytes, no in-kernel cast)
    pooled_p = pad2(pooled, B_pad, C_pad).astype(jnp.bfloat16)            # [B_pad, C_pad]

    # ---- weights: pre-transpose to [in, out], zero-pad, bf16 for big matmuls ----
    wp_t = pad2(wp.T, C_pad, F_pad).astype(jnp.bfloat16)                  # [C_pad, F_pad]
    w_fused = jnp.concatenate(                                            # [F_pad, S+Sub+T]
        [pad2(ws.T, F_pad, S_pad),
         pad2(wsub[:, :F].T, F_pad, Sub_pad),
         pad2(wt[:, :F].T, F_pad, T_pad)], axis=1).astype(jnp.bfloat16)
    # tiny sequential second-operand matmuls kept f32 for accuracy
    wsub_s = pad2(wsub[:, F:].T, S_pad, Sub_pad).astype(jnp.float32)      # [S_pad, Sub_pad]
    wt_s = pad2(wt[:, F:].T, Sub_pad, T_pad).astype(jnp.float32)          # [Sub_pad, T_pad]

    def pad_bias(b, n):
        return jnp.pad(b.astype(jnp.float32), (0, n - b.shape[0]))
    bias_all = jnp.concatenate(
        [pad_bias(bp, F_pad), pad_bias(bs, S_pad),
         pad_bias(bsub, Sub_pad), pad_bias(bt, T_pad)]).reshape(1, F_pad + N_out)

    kernel = functools.partial(lsn_kernel, f_pad=F_pad, s_pad=S_pad, sub_pad=Sub_pad)

    x_spec = pl.BlockSpec((tb, C_pad), lambda i: (i, 0))
    out_spec = pl.BlockSpec((tb, N_out), lambda i: (i, 0))
    out_shape = jax.ShapeDtypeStruct((B_pad, N_out), jnp.float32)

    # ---- VMEM budget from the actual footprint (weights + IO buffers + f32 temps) ----
    weight_bytes = ((wp_t.size + w_fused.size) * 2
                    + (wsub_s.size + wt_s.size + bias_all.size) * 4)
    io_per_buf = tb * C_pad * 2 + tb * N_out * 4
    interm_bytes = tb * (F_pad * 6 + N_out * 8)

    def make_call(single_buffer_weights):
        wbuf = 1 if single_buffer_weights else 2
        vmem_need = weight_bytes * wbuf + io_per_buf * 2 + interm_bytes
        vmem_limit = int(min(max(int(vmem_need * 1.5), 16 * 2**20), 56 * 2**20))

        def const_spec(shape):
            kwargs = {}
            if single_buffer_weights:
                # constant index_map -> never re-DMA'd; one buffer saves VMEM (v7x)
                kwargs["pipeline_mode"] = pl.Buffered(1)
            n = len(shape)
            return pl.BlockSpec(shape, lambda i, _n=n: (0,) * _n, **kwargs)

        return pl.pallas_call(
            kernel,
            grid=grid,
            in_specs=[x_spec,
                      const_spec(wp_t.shape), const_spec(w_fused.shape),
                      const_spec(wsub_s.shape), const_spec(wt_s.shape),
                      const_spec(bias_all.shape)],
            out_specs=out_spec,
            out_shape=out_shape,
            compiler_params=pltpu.CompilerParams(
                dimension_semantics=("parallel",),      # batch tiles are independent
                vmem_limit_bytes=vmem_limit),
        )

    args = (pooled_p, wp_t, w_fused, wsub_s, wt_s, bias_all)
    try:
        merged = make_call(True)(*args)
    except Exception:
        # fallback if this jax build rejects single-buffered pipeline_mode
        merged = make_call(False)(*args)

    # strip batch and lane padding; outputs share one [B_pad, S+Sub+T] slab
    super_logits = merged[:B, :S]
    sub_logits = merged[:B, S_pad:S_pad + Sub]
    target_logits = merged[:B, S_pad + Sub_pad:S_pad + Sub_pad + T]
    return target_logits, sub_logits, super_logits


def reference_forward(x, params):
    """Plain-JAX f32 reference of LogitSharing forward (with the same backbone stub)."""
    wp, bp, ws, bs, wsub, bsub, wt, bt = params
    pooled = jnp.mean(x, axis=(2, 3))
    feats = pooled @ wp.T + bp
    super_logits = feats @ ws.T + bs
    sub_logits = jnp.concatenate([feats, super_logits], axis=1) @ wsub.T + bsub
    target_logits = jnp.concatenate([feats, sub_logits], axis=1) @ wt.T + bt
    return target_logits, sub_logits, super_logits


def init_linear(key, out_f, in_f):
    """Deterministic init matching PyTorch nn.Linear shapes: W [out, in], b [out]."""
    kw, kb = jax.random.split(key)
    bound = 1.0 / jnp.sqrt(jnp.float32(in_f))
    w = jax.random.uniform(kw, (out_f, in_f), jnp.float32, -bound, bound)
    b = jax.random.uniform(kb, (out_f,), jnp.float32, -bound, bound)
    return w, b


if __name__ == "__main__":
    key = jax.random.PRNGKey(0)
    B, C, H, W = 16, 4, 16, 16      # whole batch fits one grid step (tb=16)
    NUM_FEATURES = 32               # stand-in for resnet.fc.in_features (2048 in real ResNet50)
    NUM_SUPER, NUM_SUB, NUM_TARGET = 4, 8, 16

    kx, kp, ksuper, ksub, kt = jax.random.split(key, 5)
    x = jax.random.normal(kx, (B, C, H, W), jnp.float32)

    wp, bp = init_linear(kp, NUM_FEATURES, C)                          # backbone-stub projection
    ws, bs = init_linear(ksuper, NUM_SUPER, NUM_FEATURES)              # fc_super
    wsub, bsub = init_linear(ksub, NUM_SUB, NUM_FEATURES + NUM_SUPER)  # fc_sub
    wt, bt = init_linear(kt, NUM_TARGET, NUM_FEATURES + NUM_SUB)       # fc_target
    params = (wp, bp, ws, bs, wsub, bsub, wt, bt)

    target_logits, sub_logits, super_logits = logit_sharing_forward(x, params)
    jax.block_until_ready((target_logits, sub_logits, super_logits))

    assert target_logits.shape == (B, NUM_TARGET)
    assert sub_logits.shape == (B, NUM_SUB)
    assert super_logits.shape == (B, NUM_SUPER)

    # numerical sanity vs plain-JAX f32 reference (bf16 contract on the big matmuls)
    ref_t, ref_sub, ref_super = reference_forward(x, params)
    for got, ref in ((target_logits, ref_t), (sub_logits, ref_sub), (super_logits, ref_super)):
        assert jnp.allclose(got, ref, atol=1e-1, rtol=1e-1), float(jnp.max(jnp.abs(got - ref)))

    print("KERNEL_OK")
</pallas_src>

<mosaic_0001>
module attributes {stable_mosaic.version = 11 : i64} {
  func.func @lsn_kernel(%arg0: i32, %arg1: memref<16x128xbf16, #tpu.memory_space<vmem>>, %arg2: memref<128x128xbf16, #tpu.memory_space<vmem>>, %arg3: memref<128x384xbf16, #tpu.memory_space<vmem>>, %arg4: memref<128x128xf32, #tpu.memory_space<vmem>>, %arg5: memref<128x128xf32, #tpu.memory_space<vmem>>, %arg6: memref<1x512xf32, #tpu.memory_space<vmem>>, %arg7: memref<16x384xf32, #tpu.memory_space<vmem>>) attributes {dimension_semantics = [#tpu.dimension_semantics<parallel>], iteration_bounds = array<i64: 1>, scalar_prefetch = 0 : i64, scratch_operands = 0 : i64, tpu.core_type = #tpu.core_type<tc>, window_params = [{transform_indices = @transform_0, window_bounds = array<i64: 16, 128>}, {pipeline_mode = #tpu.pipeline_mode<synchronous>, transform_indices = @transform_1, window_bounds = array<i64: 128, 128>}, {pipeline_mode = #tpu.pipeline_mode<synchronous>, transform_indices = @transform_2, window_bounds = array<i64: 128, 384>}, {pipeline_mode = #tpu.pipeline_mode<synchronous>, transform_indices = @transform_3, window_bounds = array<i64: 128, 128>}, {pipeline_mode = #tpu.pipeline_mode<synchronous>, transform_indices = @transform_4, window_bounds = array<i64: 128, 128>}, {pipeline_mode = #tpu.pipeline_mode<synchronous>, transform_indices = @transform_5, window_bounds = array<i64: 1, 512>}, {transform_indices = @transform_6, window_bounds = array<i64: 16, 384>}]} {
    %c0 = arith.constant 0 : index
    %c0_0 = arith.constant 0 : index
    %0 = vector.load %arg6[%c0, %c0_0] : memref<1x512xf32, #tpu.memory_space<vmem>>, vector<1x128xf32>
    %c0_1 = arith.constant 0 : index
    %c128 = arith.constant 128 : index
    %1 = vector.load %arg6[%c0_1, %c128] : memref<1x512xf32, #tpu.memory_space<vmem>>, vector<1x128xf32>
    %c0_2 = arith.constant 0 : index
    %c256 = arith.constant 256 : index
    %2 = vector.load %arg6[%c0_2, %c256] : memref<1x512xf32, #tpu.memory_space<vmem>>, vector<1x128xf32>
    %c0_3 = arith.constant 0 : index
    %c384 = arith.constant 384 : index
    %3 = vector.load %arg6[%c0_3, %c384] : memref<1x512xf32, #tpu.memory_space<vmem>>, vector<1x128xf32>
    %c0_4 = arith.constant 0 : index
    %c0_5 = arith.constant 0 : index
    %4 = vector.load %arg1[%c0_4, %c0_5] : memref<16x128xbf16, #tpu.memory_space<vmem>>, vector<16x128xbf16>
    %c0_6 = arith.constant 0 : index
    %c0_7 = arith.constant 0 : index
    %5 = vector.load %arg2[%c0_6, %c0_7] : memref<128x128xbf16, #tpu.memory_space<vmem>>, vector<128x128xbf16>
    %cst = arith.constant dense<0.000000e+00> : vector<16x128xf32>
    %6 = tpu.matmul %4, %5, %cst {dimension_numbers = #tpu.dot_dimension_numbers<[1], [0], [0], [1], [0, 0, 1, 1], [], []>} : vector<16x128xbf16>, vector<128x128xbf16>, vector<16x128xf32> -> vector<16x128xf32>
    %7 = vector.broadcast %0 : vector<1x128xf32> to vector<16x128xf32>
    %8 = arith.addf %6, %7 : vector<16x128xf32>
    %9 = arith.truncf %8 : vector<16x128xf32> to vector<16x128xbf16>
    %c0_8 = arith.constant 0 : index
    %c0_9 = arith.constant 0 : index
    %10 = vector.load %arg3[%c0_8, %c0_9] : memref<128x384xbf16, #tpu.memory_space<vmem>>, vector<128x384xbf16>
    %cst_10 = arith.constant dense<0.000000e+00> : vector<16x384xf32>
    %11 = tpu.matmul %9, %10, %cst_10 {dimension_numbers = #tpu.dot_dimension_numbers<[1], [0], [0], [1], [0, 0, 1, 1], [], []>} : vector<16x128xbf16>, vector<128x384xbf16>, vector<16x384xf32> -> vector<16x384xf32>
    %12 = vector.extract_strided_slice %11 {offsets = [0, 0], sizes = [16, 128], strides = [1, 1]} : vector<16x384xf32> to vector<16x128xf32>
    %13 = vector.broadcast %1 : vector<1x128xf32> to vector<16x128xf32>
    %14 = arith.addf %12, %13 : vector<16x128xf32>
    %15 = vector.extract_strided_slice %11 {offsets = [0, 128], sizes = [16, 128], strides = [1, 1]} : vector<16x384xf32> to vector<16x128xf32>
    %c0_11 = arith.constant 0 : index
    %c0_12 = arith.constant 0 : index
    %16 = vector.load %arg4[%c0_11, %c0_12] : memref<128x128xf32, #tpu.memory_space<vmem>>, vector<128x128xf32>
    %cst_13 = arith.constant dense<0.000000e+00> : vector<16x128xf32>
    %17 = tpu.matmul %14, %16, %cst_13 {dimension_numbers = #tpu.dot_dimension_numbers<[1], [0], [0], [1], [0, 0, 1, 1], [], []>} : vector<16x128xf32>, vector<128x128xf32>, vector<16x128xf32> -> vector<16x128xf32>
    %18 = arith.addf %15, %17 : vector<16x128xf32>
    %19 = vector.broadcast %2 : vector<1x128xf32> to vector<16x128xf32>
    %20 = arith.addf %18, %19 : vector<16x128xf32>
    %21 = vector.extract_strided_slice %11 {offsets = [0, 256], sizes = [16, 128], strides = [1, 1]} : vector<16x384xf32> to vector<16x128xf32>
    %c0_14 = arith.constant 0 : index
    %c0_15 = arith.constant 0 : index
    %22 = vector.load %arg5[%c0_14, %c0_15] : memref<128x128xf32, #tpu.memory_space<vmem>>, vector<128x128xf32>
    %cst_16 = arith.constant dense<0.000000e+00> : vector<16x128xf32>
    %23 = tpu.matmul %20, %22, %cst_16 {dimension_numbers = #tpu.dot_dimension_numbers<[1], [0], [0], [1], [0, 0, 1, 1], [], []>} : vector<16x128xf32>, vector<128x128xf32>, vector<16x128xf32> -> vector<16x128xf32>
    %24 = arith.addf %21, %23 : vector<16x128xf32>
    %25 = vector.broadcast %3 : vector<1x128xf32> to vector<16x128xf32>
    %26 = arith.addf %24, %25 : vector<16x128xf32>
    %c0_17 = arith.constant 0 : index
    %c0_18 = arith.constant 0 : index
    %27 = vector.load %arg7[%c0_17, %c0_18] : memref<16x384xf32, #tpu.memory_space<vmem>>, vector<16x128xf32>
    tpu.vector_store %arg7[%c0_17, %c0_18], %14 {strides = array<i32>} : memref<16x384xf32, #tpu.memory_space<vmem>>, vector<16x128xf32>,
    %c0_19 = arith.constant 0 : index
    %c128_20 = arith.constant 128 : index
    %28 = vector.load %arg7[%c0_19, %c128_20] : memref<16x384xf32, #tpu.memory_space<vmem>>, vector<16x128xf32>
    tpu.vector_store %arg7[%c0_19, %c128_20], %20 {strides = array<i32>} : memref<16x384xf32, #tpu.memory_space<vmem>>, vector<16x128xf32>,
    %c0_21 = arith.constant 0 : index
    %c256_22 = arith.constant 256 : index
    %29 = vector.load %arg7[%c0_21, %c256_22] : memref<16x384xf32, #tpu.memory_space<vmem>>, vector<16x128xf32>
    tpu.vector_store %arg7[%c0_21, %c256_22], %26 {strides = array<i32>} : memref<16x384xf32, #tpu.memory_space<vmem>>, vector<16x128xf32>,
    return
  }
  func.func @transform_0(%arg0: i32) -> (i32, i32) {
    %c0_i32 = arith.constant 0 : i32
    %c0_i32_0 = arith.constant 0 : i32
    return %arg0, %c0_i32 : i32, i32
  }
  func.func @transform_1(%arg0: i32) -> (i32, i32) {
    %c0_i32 = arith.constant 0 : i32
    %c0_i32_0 = arith.constant 0 : i32
    %c0_i32_1 = arith.constant 0 : i32
    return %c0_i32, %c0_i32_0 : i32, i32
  }
  func.func @transform_2(%arg0: i32) -> (i32, i32) {
    %c0_i32 = arith.constant 0 : i32
    %c0_i32_0 = arith.constant 0 : i32
    %c0_i32_1 = arith.constant 0 : i32
    return %c0_i32, %c0_i32_0 : i32, i32
  }
  func.func @transform_3(%arg0: i32) -> (i32, i32) {
    %c0_i32 = arith.constant 0 : i32
    %c0_i32_0 = arith.constant 0 : i32
    %c0_i32_1 = arith.constant 0 : i32
    return %c0_i32, %c0_i32_0 : i32, i32
  }
  func.func @transform_4(%arg0: i32) -> (i32, i32) {
    %c0_i32 = arith.constant 0 : i32
    %c0_i32_0 = arith.constant 0 : i32
    %c0_i32_1 = arith.constant 0 : i32
    return %c0_i32, %c0_i32_0 : i32, i32
  }
  func.func @transform_5(%arg0: i32) -> (i32, i32) {
    %c0_i32 = arith.constant 0 : i32
    %c0_i32_0 = arith.constant 0 : i32
    %c0_i32_1 = arith.constant 0 : i32
    return %c0_i32, %c0_i32_0 : i32, i32
  }
  func.func @transform_6(%arg0: i32) -> (i32, i32) {
    %c0_i32 = arith.constant 0 : i32
    %c0_i32_0 = arith.constant 0 : i32
    return %arg0, %c0_i32 : i32, i32
  }
}

module attributes {stable_mosaic.version = 11 : i64} {
  func.func @lsn_kernel(%arg0: i32, %arg1: memref<16x128xbf16, #tpu.memory_space<vmem>>, %arg2: memref<128x128xbf16, #tpu.memory_space<vmem>>, %arg3: memref<128x384xbf16, #tpu.memory_space<vmem>>, %arg4: memref<128x128xf32, #tpu.memory_space<vmem>>, %arg5: memref<128x128xf32, #tpu.memory_space<vmem>>, %arg6: memref<1x512xf32, #tpu.memory_space<vmem>>, %arg7: memref<16x384xf32, #tpu.memory_space<vmem>>) attributes {dimension_semantics = [#tpu.dimension_semantics<parallel>], iteration_bounds = array<i64: 1>, scalar_prefetch = 0 : i64, scratch_operands = 0 : i64, tpu.core_type = #tpu.core_type<tc>, window_params = [{transform_indices = @transform_0, window_bounds = array<i64: 16, 128>}, {pipeline_mode = #tpu.pipeline_mode<synchronous>, transform_indices = @transform_1, window_bounds = array<i64: 128, 128>}, {pipeline_mode = #tpu.pipeline_mode<synchronous>, transform_indices = @transform_2, window_bounds = array<i64: 128, 384>}, {pipeline_mode = #tpu.pipeline_mode<synchronous>, transform_indices = @transform_3, window_bounds = array<i64: 128, 128>}, {pipeline_mode = #tpu.pipeline_mode<synchronous>, transform_indices = @transform_4, window_bounds = array<i64: 128, 128>}, {pipeline_mode = #tpu.pipeline_mode<synchronous>, transform_indices = @transform_5, window_bounds = array<i64: 1, 512>}, {transform_indices = @transform_6, window_bounds = array<i64: 16, 384>}]} {
    %c0 = arith.constant 0 : index
    %c0_0 = arith.constant 0 : index
    %0 = vector.load %arg6[%c0, %c0_0] : memref<1x512xf32, #tpu.memory_space<vmem>>, vector<1x128xf32>
    %c0_1 = arith.constant 0 : index
    %c128 = arith.constant 128 : index
    %1 = vector.load %arg6[%c0_1, %c128] : memref<1x512xf32, #tpu.memory_space<vmem>>, vector<1x128xf32>
    %c0_2 = arith.constant 0 : index
    %c256 = arith.constant 256 : index
    %2 = vector.load %arg6[%c0_2, %c256] : memref<1x512xf32, #tpu.memory_space<vmem>>, vector<1x128xf32>
    %c0_3 = arith.constant 0 : index
    %c384 = arith.constant 384 : index
    %3 = vector.load %arg6[%c0_3, %c384] : memref<1x512xf32, #tpu.memory_space<vmem>>, vector<1x128xf32>
    %c0_4 = arith.constant 0 : index
    %c0_5 = arith.constant 0 : index
    %4 = vector.load %arg1[%c0_4, %c0_5] : memref<16x128xbf16, #tpu.memory_space<vmem>>, vector<16x128xbf16>
    %c0_6 = arith.constant 0 : index
    %c0_7 = arith.constant 0 : index
    %5 = vector.load %arg2[%c0_6, %c0_7] : memref<128x128xbf16, #tpu.memory_space<vmem>>, vector<128x128xbf16>
    %cst = arith.constant dense<0.000000e+00> : vector<16x128xf32>
    %6 = tpu.matmul %4, %5, %cst {dimension_numbers = #tpu.dot_dimension_numbers<[1], [0], [0], [1], [0, 0, 1, 1], [], []>} : vector<16x128xbf16>, vector<128x128xbf16>, vector<16x128xf32> -> vector<16x128xf32>
    %7 = vector.broadcast %0 : vector<1x128xf32> to vector<16x128xf32>
    %8 = arith.addf %6, %7 : vector<16x128xf32>
    %9 = arith.truncf %8 : vector<16x128xf32> to vector<16x128xbf16>
    %c0_8 = arith.constant 0 : index
    %c0_9 = arith.constant 0 : index
    %10 = vector.load %arg3[%c0_8, %c0_9] : memref<128x384xbf16, #tpu.memory_space<vmem>>, vector<128x384xbf16>
    %cst_10 = arith.constant dense<0.000000e+00> : vector<16x384xf32>
    %11 = tpu.matmul %9, %10, %cst_10 {dimension_numbers = #tpu.dot_dimension_numbers<[1], [0], [0], [1], [0, 0, 1, 1], [], []>} : vector<16x128xbf16>, vector<128x384xbf16>, vector<16x384xf32> -> vector<16x384xf32>
    %12 = vector.extract_strided_slice %11 {offsets = [0, 0], sizes = [16, 128], strides = [1, 1]} : vector<16x384xf32> to vector<16x128xf32>
    %13 = vector.broadcast %1 : vector<1x128xf32> to vector<16x128xf32>
    %14 = arith.addf %12, %13 : vector<16x128xf32>
    %15 = vector.extract_strided_slice %11 {offsets = [0, 128], sizes = [16, 128], strides = [1, 1]} : vector<16x384xf32> to vector<16x128xf32>
    %c0_11 = arith.constant 0 : index
    %c0_12 = arith.constant 0 : index
    %16 = vector.load %arg4[%c0_11, %c0_12] : memref<128x128xf32, #tpu.memory_space<vmem>>, vector<128x128xf32>
    %cst_13 = arith.constant dense<0.000000e+00> : vector<16x128xf32>
    %17 = tpu.matmul %14, %16, %cst_13 {dimension_numbers = #tpu.dot_dimension_numbers<[1], [0], [0], [1], [0, 0, 1, 1], [], []>} : vector<16x128xf32>, vector<128x128xf32>, vector<16x128xf32> -> vector<16x128xf32>
    %18 = arith.addf %15, %17 : vector<16x128xf32>
    %19 = vector.broadcast %2 : vector<1x128xf32> to vector<16x128xf32>
    %20 = arith.addf %18, %19 : vector<16x128xf32>
    %21 = vector.extract_strided_slice %11 {offsets = [0, 256], sizes = [16, 128], strides = [1, 1]} : vector<16x384xf32> to vector<16x128xf32>
    %c0_14 = arith.constant 0 : index
    %c0_15 = arith.constant 0 : index
    %22 = vector.load %arg5[%c0_14, %c0_15] : memref<128x128xf32, #tpu.memory_space<vmem>>, vector<128x128xf32>
    %cst_16 = arith.constant dense<0.000000e+00> : vector<16x128xf32>
    %23 = tpu.matmul %20, %22, %cst_16 {dimension_numbers = #tpu.dot_dimension_numbers<[1], [0], [0], [1], [0, 0, 1, 1], [], []>} : vector<16x128xf32>, vector<128x128xf32>, vector<16x128xf32> -> vector<16x128xf32>
    %24 = arith.addf %21, %23 : vector<16x128xf32>
    %25 = vector.broadcast %3 : vector<1x128xf32> to vector<16x128xf32>
    %26 = arith.addf %24, %25 : vector<16x128xf32>
    %c0_17 = arith.constant 0 : index
    %c0_18 = arith.constant 0 : index
    %27 = vector.load %arg7[%c0_17, %c0_18] : memref<16x384xf32, #tpu.memory_space<vmem>>, vector<16x128xf32>
    tpu.vector_store %arg7[%c0_17, %c0_18], %14 {strides = array<i32>} : memref<16x384xf32, #tpu.memory_space<vmem>>, vector<16x128xf32>,
    %c0_19 = arith.constant 0 : index
    %c128_20 = arith.constant 128 : index
    %28 = vector.load %arg7[%c0_19, %c128_20] : memref<16x384xf32, #tpu.memory_space<vmem>>, vector<16x128xf32>
    tpu.vector_store %arg7[%c0_19, %c128_20], %20 {strides = array<i32>} : memref<16x384xf32, #tpu.memory_space<vmem>>, vector<16x128xf32>,
    %c0_21 = arith.constant 0 : index
    %c256_22 = arith.constant 256 : index
    %29 = vector.load %arg7[%c0_21, %c256_22] : memref<16x384xf32, #tpu.memory_space<vmem>>, vector<16x128xf32>
    tpu.vector_store %arg7[%c0_21, %c256_22], %26 {strides = array<i32>} : memref<16x384xf32, #tpu.memory_space<vmem>>, vector<16x128xf32>,
    return
  }
  func.func @transform_0(%arg0: i32) -> (i32, i32) {
    %c0_i32 = arith.constant 0 : i32
    %c0_i32_0 = arith.constant 0 : i32
    return %arg0, %c0_i32 : i32, i32
  }
  func.func @transform_1(%arg0: i32) -> (i32, i32) {
    %c0_i32 = arith.constant 0 : i32
    %c0_i32_0 = arith.constant 0 : i32
    %c0_i32_1 = arith.constant 0 : i32
    return %c0_i32, %c0_i32_0 : i32, i32
  }
  func.func @transform_2(%arg0: i32) -> (i32, i32) {
    %c0_i32 = arith.constant 0 : i32
    %c0_i32_0 = arith.constant 0 : i32
    %c0_i32_1 = arith.constant 0 : i32
    return %c0_i32, %c0_i32_0 : i32, i32
  }
  func.func @transform_3(%arg0: i32) -> (i32, i32) {
    %c0_i32 = arith.constant 0 : i32
    %c0_i32_0 = arith.constant 0 : i32
    %c0_i32_1 = arith.constant 0 : i32
    return %c0_i32, %c0_i32_0 : i32, i32
  }
  func.func @transform_4(%arg0: i32) -> (i32, i32) {
    %c0_i32 = arith.constant 0 : i32
    %c0_i32_0 = arith.constant 0 : i32
    %c0_i32_1 = arith.constant 0 : i32
    return %c0_i32, %c0_i32_0 : i32, i32
  }
  func.func @transform_5(%arg0: i32) -> (i32, i32) {
    %c0_i32 = arith.constant 0 : i32
    %c0_i32_0 = arith.constant 0 : i32
    %c0_i32_1 = arith.constant 0 : i32
    return %c0_i32, %c0_i32_0 : i32, i32
  }
  func.func @transform_6(%arg0: i32) -> (i32, i32) {
    %c0_i32 = arith.constant 0 : i32
    %c0_i32_0 = arith.constant 0 : i32
    return %arg0, %c0_i32 : i32, i32
  }
}

</mosaic_0001>

<llo_original>
// kernel: tpu_custom_call.1
$region0: #{tpu_custom_call.1}
  #allocation0 [shape = 'u32[]', space=smem, size = 0x4, offset = 0x4, fixed_abs, tag = 'smem constant byte address 0x4 - core index']
  #allocation1 [shape = 'u32[144,128]{1,0:T(1,128)}', space=vmem, size = 0x12000, scoped, tag = 'internal scratch']
  %s0 = inlined_call_operand.hbm [shape: bf16[16,128], index: 0, kind: input, shape index: {}]
  %s1 = inlined_call_operand.hbm [shape: bf16[128,128], index: 1, kind: input, shape index: {}]
  %s2 = inlined_call_operand.hbm [shape: bf16[128,384], index: 2, kind: input, shape index: {}]
  %s3 = inlined_call_operand.hbm [shape: f32[128,128], index: 3, kind: input, shape index: {}]
  %s4 = inlined_call_operand.hbm [shape: f32[128,128], index: 4, kind: input, shape index: {}]
  %s5 = inlined_call_operand.vmem [shape: f32[1,512], index: 5, kind: input, shape index: {}]
  %s6 = inlined_call_operand.hbm [shape: f32[16,384], index: 6, kind: output, shape index: {}]
  %s7 = sld [smem:[#allocation0]]
  $region54: #{tpu_custom_call.1} parent=0
    _
  %s9 = ssub.s32 1, %s7
  %s10 = scalar_select 0, %s9, %s7
  $region1: #{tpu_custom_call.1} parent=0
    #allocation2 [shape = 'u8[4096]{0}', space=vmem, size = 0x1000, scoped, tag = 'input window, operand 0, single buffered']
    #allocation3 [shape = 's32[1]{0}', space=sflag, size = 0x4, scoped, tag = 'scoped memory for tpu_custom_call.1']
    #allocation4 [shape = 's32[1]{0}', space=sflag, size = 0x4, scoped, tag = 'scoped memory for tpu_custom_call.1']
    #allocation5 [shape = 'u8[32768]{0}', space=vmem, size = 0x8000, scoped, tag = 'input window, operand 1, single buffered']
    #allocation6 [shape = 's32[1]{0}', space=sflag, size = 0x4, scoped, tag = 'scoped memory for tpu_custom_call.1']
    #allocation7 [shape = 'u8[98304]{0}', space=vmem, size = 0x18000, scoped, tag = 'input window, operand 2, single buffered']
    #allocation8 [shape = 'u8[65536]{0}', space=vmem, size = 0x10000, scoped, tag = 'input window, operand 3, single buffered']
    #allocation9 [shape = 's32[1]{0}', space=sflag, size = 0x4, scoped, tag = 'scoped memory for tpu_custom_call.1']
    #allocation10 [shape = 'u8[65536]{0}', space=vmem, size = 0x10000, scoped, tag = 'input window, operand 4, single buffered']
    #allocation11 [shape = 'u8[24576]{0}', space=vmem, size = 0x6000, scoped, tag = 'output window, operand 0, single buffered']
    %11 = vsyncpa [#allocation3], 0
    %12 = vsyncpa [#allocation6], 0
    %13 = vsyncpa [#allocation9], 0
    %14 = vsyncpa [#allocation4], 0
    // Predicated region
    $region2: #{tpu_custom_call.1} parent=1 // pred_check
      _
    $region3: #{tpu_custom_call.1} parent=1 // pred_check_branch
      %16 = sbr.rel (0) target = $region5
    $region4: #{tpu_custom_call.1} parent=1 // pred_region
      %s18 = ssub.s32 128, 128
      %19 = vsyncadd [#allocation3], %s18
      %s20 = sshll.u32 [#allocation2], 4
      %s21 = int_to_ptr.vmem [resolvable:$true] %s20
      %26 = dma.hbm_to_vmem [thread:$0]  %s0, 128, %s21, [#allocation3], 64, 64, 4
    $region5: #{tpu_custom_call.1} parent=1 // pred_fallthru
      _
    // Predicated region
    $region6: #{tpu_custom_call.1} parent=1 // pred_check
      _
    $region7: #{tpu_custom_call.1} parent=1 // pred_check_branch
      %28 = sbr.rel (0) target = $region9
    $region8: #{tpu_custom_call.1} parent=1 // pred_region
      %s30 = ssub.s32 1024, 1024
      %31 = vsyncadd [#allocation6], %s30
      %s32 = sshll.u32 [#allocation5], 4
      %s33 = int_to_ptr.vmem [resolvable:$true] %s32
      %38 = dma.hbm_to_vmem [thread:$0]  %s1, 1024, %s33, [#allocation6], 64, 64, 4
    $region9: #{tpu_custom_call.1} parent=1 // pred_fallthru
      _
    // Predicated region
    $region10: #{tpu_custom_call.1} parent=1 // pred_check
      _
    $region11: #{tpu_custom_call.1} parent=1 // pred_check_branch
      %40 = sbr.rel (0) target = $region13
    $region12: #{tpu_custom_call.1} parent=1 // pred_region
      %s42 = ssub.s32 3072, 3072
      %43 = vsyncadd [#allocation6], %s42
      %s44 = sshll.u32 [#allocation7], 4
      %s45 = int_to_ptr.vmem [resolvable:$true] %s44
      %50 = dma.hbm_to_vmem [thread:$0]  %s2, 3072, %s45, [#allocation6], 192, 192, 12
    $region13: #{tpu_custom_call.1} parent=1 // pred_fallthru
      _
    // Predicated region
    $region14: #{tpu_custom_call.1} parent=1 // pred_check
      _
    $region15: #{tpu_custom_call.1} parent=1 // pred_check_branch
      %52 = sbr.rel (0) target = $region17
    $region16: #{tpu_custom_call.1} parent=1 // pred_region
      %s54 = ssub.s32 2048, 2048
      %55 = vsyncadd [#allocation9], %s54
      %s56 = sshll.u32 [#allocation8], 4
      %s57 = int_to_ptr.vmem [resolvable:$true] %s56
      %62 = dma.hbm_to_vmem [thread:$0]  %s3, 2048, %s57, [#allocation9], 128, 128, 8
    $region17: #{tpu_custom_call.1} parent=1 // pred_fallthru
      _
    // Predicated region
    $region18: #{tpu_custom_call.1} parent=1 // pred_check
      _
    $region19: #{tpu_custom_call.1} parent=1 // pred_check_branch
      %64 = sbr.rel (0) target = $region21
    $region20: #{tpu_custom_call.1} parent=1 // pred_region
      %s66 = ssub.s32 2048, 2048
      %67 = vsyncadd [#allocation9], %s66
      %s68 = sshll.u32 [#allocation10], 4
      %s69 = int_to_ptr.vmem [resolvable:$true] %s68
      %74 = dma.hbm_to_vmem [thread:$0]  %s4, 2048, %s69, [#allocation9], 128, 128, 8
    $region21: #{tpu_custom_call.1} parent=1 // pred_fallthru
      _
    // Predicated region
    $region22: #{tpu_custom_call.1} parent=1 // pred_check
      _
    $region23: #{tpu_custom_call.1} parent=1 // pred_check_branch
      %76 = sbr.rel (0) target = $region25
    $region24: #{tpu_custom_call.1} parent=1 // pred_region
      _
    $region25: #{tpu_custom_call.1} parent=1 // pred_fallthru
      _
    // Predicated region
    $region26: #{tpu_custom_call.1} parent=1 // pred_check
      _
    $region27: #{tpu_custom_call.1} parent=1 // pred_check_branch
      %78 = sbr.rel (0) target = $region29
    $region28: #{tpu_custom_call.1} parent=1 // pred_region
      %79 = dma.done [#allocation3], 128
    $region29: #{tpu_custom_call.1} parent=1 // pred_fallthru
      _
    // Predicated region
    $region30: #{tpu_custom_call.1} parent=1 // pred_check
      _
    $region31: #{tpu_custom_call.1} parent=1 // pred_check_branch
      %81 = sbr.rel (0) target = $region33
    $region32: #{tpu_custom_call.1} parent=1 // pred_region
      %82 = dma.done [#allocation6], 1024
    $region33: #{tpu_custom_call.1} parent=1 // pred_fallthru
      _
    // Predicated region
    $region34: #{tpu_custom_call.1} parent=1 // pred_check
      _
    $region35: #{tpu_custom_call.1} parent=1 // pred_check_branch
      %84 = sbr.rel (0) target = $region37
    $region36: #{tpu_custom_call.1} parent=1 // pred_region
      %85 = dma.done [#allocation6], 3072
    $region37: #{tpu_custom_call.1} parent=1 // pred_fallthru
      _
    // Predicated region
    $region38: #{tpu_custom_call.1} parent=1 // pred_check
      _
    $region39: #{tpu_custom_call.1} parent=1 // pred_check_branch
      %87 = sbr.rel (0) target = $region41
    $region40: #{tpu_custom_call.1} parent=1 // pred_region
      %88 = dma.done [#allocation9], 2048
    $region41: #{tpu_custom_call.1} parent=1 // pred_fallthru
      _
    // Predicated region
    $region42: #{tpu_custom_call.1} parent=1 // pred_check
      _
    $region43: #{tpu_custom_call.1} parent=1 // pred_check_branch
      %90 = sbr.rel (0) target = $region45
    $region44: #{tpu_custom_call.1} parent=1 // pred_region
      %91 = dma.done [#allocation9], 2048
    $region45: #{tpu_custom_call.1} parent=1 // pred_fallthru
      _
    %v93 = vld [vmem:[%s5] sm:$0x1]
    %v94 = vld [vmem:[%s5 + $0x1] sm:$0x1]
    %v95 = vld [vmem:[%s5 + $0x2] sm:$0x1]
    %v96 = vld [vmem:[%s5 + $0x3] sm:$0x1]
    %v97 = vld [vmem:[#allocation2] sm:$0xf]
    %v98 = vld [vmem:[#allocation2 + $0x4] sm:$0xf]
    %v99 = vld [vmem:[#allocation5] sm:$0xf]
    %v100 = vld [vmem:[#allocation5 + $0x4] sm:$0xf]
    %v101 = vld [vmem:[#allocation5 + $0x8] sm:$0xf]
    %v102 = vld [vmem:[#allocation5 + $0xc] sm:$0xf]
    %v103 = vld [vmem:[#allocation5 + $0x10] sm:$0xf]
    %v104 = vld [vmem:[#allocation5 + $0x14] sm:$0xf]
    %v105 = vld [vmem:[#allocation5 + $0x18] sm:$0xf]
    %v106 = vld [vmem:[#allocation5 + $0x1c] sm:$0xf]
    %v107 = vld [vmem:[#allocation5 + $0x20] sm:$0xf]
    %v108 = vld [vmem:[#allocation5 + $0x24] sm:$0xf]
    %v109 = vld [vmem:[#allocation5 + $0x28] sm:$0xf]
    %v110 = vld [vmem:[#allocation5 + $0x2c] sm:$0xf]
    %v111 = vld [vmem:[#allocation5 + $0x30] sm:$0xf]
    %v112 = vld [vmem:[#allocation5 + $0x34] sm:$0xf]
    %v113 = vld [vmem:[#allocation5 + $0x38] sm:$0xf]
    %v114 = vld [vmem:[#allocation5 + $0x3c] sm:$0xf]
    %v116 = vlaneseq
    %v117 = vshrl.u32 %v116, 7
    %v118 = vsub.s32 0, %v117
    %v119 = vrot.slane %v93, %v118
    %v123 = vunpack.c.l.b16 %v97
    %v124 = vunpack.c.l.b16 %v98
    %v125 = vpack.c.b16 %v124, %v123
    %v143 = vunpack.c.l.b16 %v99
    %v144 = vunpack.c.l.b16 %v100
    %v145 = vunpack.c.l.b16 %v101
    %v146 = vunpack.c.l.b16 %v102
    %v147 = vunpack.c.l.b16 %v103
    %v148 = vunpack.c.l.b16 %v104
    %v149 = vunpack.c.l.b16 %v105
    %v150 = vunpack.c.l.b16 %v106
    %v151 = vunpack.c.l.b16 %v107
    %v152 = vunpack.c.l.b16 %v108
    %v153 = vunpack.c.l.b16 %v109
    %v154 = vunpack.c.l.b16 %v110
    %v155 = vunpack.c.l.b16 %v111
    %v156 = vunpack.c.l.b16 %v112
    %v157 = vunpack.c.l.b16 %v113
    %v158 = vunpack.c.l.b16 %v114
    %v159 = vpack.c.b16 %v144, %v143
    %v160 = vpack.c.b16 %v146, %v145
    %v161 = vpack.c.b16 %v148, %v147
    %v162 = vpack.c.b16 %v150, %v149
    %v163 = vpack.c.b16 %v152, %v151
    %v164 = vpack.c.b16 %v154, %v153
    %v165 = vpack.c.b16 %v156, %v155
    %v166 = vpack.c.b16 %v158, %v157
    %175 = vmatprep.subr.bf16.mxu0 0
    %176 = vmatpush1.bf16.msra.mxu0 %v159
    %177 = vmatprep.subr.bf16.mxu0 0
    %178 = vmatpush1.bf16.msra.mxu0 %v160
    %179 = vmatprep.subr.bf16.mxu0 0
    %180 = vmatpush1.bf16.msra.mxu0 %v161
    %181 = vmatprep.subr.bf16.mxu0 0
    %182 = vmatpush1.bf16.msra.mxu0 %v162
    %183 = vmatprep.subr.bf16.mxu0 0
    %184 = vmatpush1.bf16.msra.mxu0 %v163
    %185 = vmatprep.subr.bf16.mxu0 0
    %186 = vmatpush1.bf16.msra.mxu0 %v164
    %187 = vmatprep.subr.bf16.mxu0 0
    %188 = vmatpush1.bf16.msra.mxu0 %v165
    %189 = vmatprep.subr.bf16.mxu0 0
    %190 = vmatpush1.bf16.msra.mxu0 %v166
    %191 = vmatprep.subr.bf16.mxu0 0
    %192 = vmatpush1.bf16.msra.mxu0 0
    %193 = vmatprep.subr.bf16.mxu0 0
    %194 = vmatpush1.bf16.msra.mxu0 0
    %195 = vmatprep.subr.bf16.mxu0 0
    %196 = vmatpush1.bf16.msra.mxu0 0
    %197 = vmatprep.subr.bf16.mxu0 0
    %198 = vmatpush1.bf16.msra.mxu0 0
    %199 = vmatprep.subr.bf16.mxu0 0
    %200 = vmatpush1.bf16.msra.mxu0 0
    %201 = vmatprep.subr.bf16.mxu0 0
    %202 = vmatpush1.bf16.msra.mxu0 0
    %203 = vmatprep.subr.bf16.mxu0 0
    %204 = vmatpush1.bf16.msra.mxu0 0
    %205 = vmatprep.subr.bf16.mxu0 0
    %206 = vmatpush1.bf16.msra.mxu0 0
    %207 = vmatprep.mubr.bf16.mxu0 0
    %208 = vmatmul.mubr.bf16.gmra.mrb[0].mxu0 %v125
    %v209 = vpop.f32.mrb[0].mxu0
    %v210 = vadd.f32 %v119, %v209
    %v211 = vpop.f32.mrb[0].mxu0
    %v212 = vpop.f32.mrb[0].mxu0
    %v213 = vadd.f32 %v119, %v212
    %v214 = vpop.f32.mrb[0].mxu0
    %215 = vdwg.mxu0
    %v216 = vpack.c.bf16 %v213, %v210
    %v217 = vld [vmem:[#allocation7] sm:$0xff]
    %v218 = vld [vmem:[#allocation7 + $0x8] sm:$0xf]
    %v219 = vld [vmem:[#allocation7 + $0xc] sm:$0xff]
    %v220 = vld [vmem:[#allocation7 + $0x14] sm:$0xf]
    %v221 = vld [vmem:[#allocation7 + $0x18] sm:$0xff]
    %v222 = vld [vmem:[#allocation7 + $0x20] sm:$0xf]
    %v223 = vld [vmem:[#allocation7 + $0x24] sm:$0xff]
    %v224 = vld [vmem:[#allocation7 + $0x2c] sm:$0xf]
    %v225 = vld [vmem:[#allocation7 + $0x30] sm:$0xff]
    %v226 = vld [vmem:[#allocation7 + $0x38] sm:$0xf]
    %v227 = vld [vmem:[#allocation7 + $0x3c] sm:$0xff]
    %v228 = vld [vmem:[#allocation7 + $0x44] sm:$0xf]
    %v229 = vld [vmem:[#allocation7 + $0x48] sm:$0xff]
    %v230 = vld [vmem:[#allocation7 + $0x50] sm:$0xf]
    %v231 = vld [vmem:[#allocation7 + $0x54] sm:$0xff]
    %v232 = vld [vmem:[#allocation7 + $0x5c] sm:$0xf]
    %v233 = vld [vmem:[#allocation7 + $0x60] sm:$0xff]
    %v234 = vld [vmem:[#allocation7 + $0x68] sm:$0xf]
    %v235 = vld [vmem:[#allocation7 + $0x6c] sm:$0xff]
    %v236 = vld [vmem:[#allocation7 + $0x74] sm:$0xf]
    %v237 = vld [vmem:[#allocation7 + $0x78] sm:$0xff]
    %v238 = vld [vmem:[#allocation7 + $0x80] sm:$0xf]
    %v239 = vld [vmem:[#allocation7 + $0x84] sm:$0xff]
    %v240 = vld [vmem:[#allocation7 + $0x8c] sm:$0xf]
    %v241 = vld [vmem:[#allocation7 + $0x90] sm:$0xff]
    %v242 = vld [vmem:[#allocation7 + $0x98] sm:$0xf]
    %v243 = vld [vmem:[#allocation7 + $0x9c] sm:$0xff]
    %v244 = vld [vmem:[#allocation7 + $0xa4] sm:$0xf]
    %v245 = vld [vmem:[#allocation7 + $0xa8] sm:$0xff]
    %v246 = vld [vmem:[#allocation7 + $0xb0] sm:$0xf]
    %v247 = vld [vmem:[#allocation7 + $0xb4] sm:$0xff]
    %v248 = vld [vmem:[#allocation7 + $0xbc] sm:$0xf]
    %v281 = vunpack.c.l.b16 %v217
    %v282 = vunpack.c.h.b16 %v217
    %v283 = vunpack.c.l.b16 %v218
    %v284 = vunpack.c.l.b16 %v219
    %v285 = vunpack.c.h.b16 %v219
    %v286 = vunpack.c.l.b16 %v220
    %v287 = vunpack.c.l.b16 %v221
    %v288 = vunpack.c.h.b16 %v221
    %v289 = vunpack.c.l.b16 %v222
    %v290 = vunpack.c.l.b16 %v223
    %v291 = vunpack.c.h.b16 %v223
    %v292 = vunpack.c.l.b16 %v224
    %v293 = vunpack.c.l.b16 %v225
    %v294 = vunpack.c.h.b16 %v225
    %v295 = vunpack.c.l.b16 %v226
    %v296 = vunpack.c.l.b16 %v227
    %v297 = vunpack.c.h.b16 %v227
    %v298 = vunpack.c.l.b16 %v228
    %v299 = vunpack.c.l.b16 %v229
    %v300 = vunpack.c.h.b16 %v229
    %v301 = vunpack.c.l.b16 %v230
    %v302 = vunpack.c.l.b16 %v231
    %v303 = vunpack.c.h.b16 %v231
    %v304 = vunpack.c.l.b16 %v232
    %v305 = vunpack.c.l.b16 %v233
    %v306 = vunpack.c.h.b16 %v233
    %v307 = vunpack.c.l.b16 %v234
    %v308 = vunpack.c.l.b16 %v235
    %v309 = vunpack.c.h.b16 %v235
    %v310 = vunpack.c.l.b16 %v236
    %v311 = vunpack.c.l.b16 %v237
    %v312 = vunpack.c.h.b16 %v237
    %v313 = vunpack.c.l.b16 %v238
    %v314 = vunpack.c.l.b16 %v239
    %v315 = vunpack.c.h.b16 %v239
    %v316 = vunpack.c.l.b16 %v240
    %v317 = vunpack.c.l.b16 %v241
    %v318 = vunpack.c.h.b16 %v241
    %v319 = vunpack.c.l.b16 %v242
    %v320 = vunpack.c.l.b16 %v243
    %v321 = vunpack.c.h.b16 %v243
    %v322 = vunpack.c.l.b16 %v244
    %v323 = vunpack.c.l.b16 %v245
    %v324 = vunpack.c.h.b16 %v245
    %v325 = vunpack.c.l.b16 %v246
    %v326 = vunpack.c.l.b16 %v247
    %v327 = vunpack.c.h.b16 %v247
    %v328 = vunpack.c.l.b16 %v248
    %v329 = vpack.c.b16 %v284, %v281
    %v330 = vpack.c.b16 %v285, %v282
    %v331 = vpack.c.b16 %v286, %v283
    %v332 = vpack.c.b16 %v290, %v287
    %v333 = vpack.c.b16 %v291, %v288
    %v334 = vpack.c.b16 %v292, %v289
    %v335 = vpack.c.b16 %v296, %v293
    %v336 = vpack.c.b16 %v297, %v294
    %v337 = vpack.c.b16 %v298, %v295
    %v338 = vpack.c.b16 %v302, %v299
    %v339 = vpack.c.b16 %v303, %v300
    %v340 = vpack.c.b16 %v304, %v301
    %v341 = vpack.c.b16 %v308, %v305
    %v342 = vpack.c.b16 %v309, %v306
    %v343 = vpack.c.b16 %v310, %v307
    %v344 = vpack.c.b16 %v314, %v311
    %v345 = vpack.c.b16 %v315, %v312
    %v346 = vpack.c.b16 %v316, %v313
    %v347 = vpack.c.b16 %v320, %v317
    %v348 = vpack.c.b16 %v321, %v318
    %v349 = vpack.c.b16 %v322, %v319
    %v350 = vpack.c.b16 %v326, %v323
    %v351 = vpack.c.b16 %v327, %v324
    %v352 = vpack.c.b16 %v328, %v325
    %377 = vmatprep.subr.bf16.mxu0 %v330
    %378 = vmatpush1.bf16.msra.mxu0 %v329
    %379 = vmatprep.subr.bf16.mxu0 %v333
    %380 = vmatpush1.bf16.msra.mxu0 %v332
    %381 = vmatprep.subr.bf16.mxu0 %v336
    %382 = vmatpush1.bf16.msra.mxu0 %v335
    %383 = vmatprep.subr.bf16.mxu0 %v339
    %384 = vmatpush1.bf16.msra.mxu0 %v338
    %385 = vmatprep.subr.bf16.mxu0 %v342
    %386 = vmatpush1.bf16.msra.mxu0 %v341
    %387 = vmatprep.subr.bf16.mxu0 %v345
    %388 = vmatpush1.bf16.msra.mxu0 %v344
    %389 = vmatprep.subr.bf16.mxu0 %v348
    %390 = vmatpush1.bf16.msra.mxu0 %v347
    %391 = vmatprep.subr.bf16.mxu0 %v351
    %392 = vmatpush1.bf16.msra.mxu0 %v350
    %393 = vmatprep.subr.bf16.mxu0 0
    %394 = vmatpush1.bf16.msra.mxu0 0
    %395 = vmatprep.subr.bf16.mxu0 0
    %396 = vmatpush1.bf16.msra.mxu0 0
    %397 = vmatprep.subr.bf16.mxu0 0
    %398 = vmatpush1.bf16.msra.mxu0 0
    %399 = vmatprep.subr.bf16.mxu0 0
    %400 = vmatpush1.bf16.msra.mxu0 0
    %401 = vmatprep.subr.bf16.mxu0 0
    %402 = vmatpush1.bf16.msra.mxu0 0
    %403 = vmatprep.subr.bf16.mxu0 0
    %404 = vmatpush1.bf16.msra.mxu0 0
    %405 = vmatprep.subr.bf16.mxu0 0
    %406 = vmatpush1.bf16.msra.mxu0 0
    %407 = vmatprep.subr.bf16.mxu0 0
    %408 = vmatpush1.bf16.msra.mxu0 0
    %409 = vmatprep.mubr.bf16.mxu0 0
    %410 = vmatmul.mubr.bf16.gmra.mrb[0].mxu0 %v216
    %v411 = vpop.f32.mrb[0].mxu0
    %v412 = vadd.f32 0.0, %v411
    %v413 = vpop.f32.mrb[0].mxu0
    %v414 = vadd.f32 0.0, %v413
    %v415 = vpop.f32.mrb[0].mxu0
    %v416 = vadd.f32 0.0, %v415
    %v417 = vpop.f32.mrb[0].mxu0
    %v418 = vadd.f32 0.0, %v417
    %419 = vdwg.mxu0
    %420 = vmatprep.subr.bf16.mxu0 0
    %421 = vmatpush1.bf16.msra.mxu0 %v331
    %422 = vmatprep.subr.bf16.mxu0 0
    %423 = vmatpush1.bf16.msra.mxu0 %v334
    %424 = vmatprep.subr.bf16.mxu0 0
    %425 = vmatpush1.bf16.msra.mxu0 %v337
    %426 = vmatprep.subr.bf16.mxu0 0
    %427 = vmatpush1.bf16.msra.mxu0 %v340
    %428 = vmatprep.subr.bf16.mxu0 0
    %429 = vmatpush1.bf16.msra.mxu0 %v343
    %430 = vmatprep.subr.bf16.mxu0 0
    %431 = vmatpush1.bf16.msra.mxu0 %v346
    %432 = vmatprep.subr.bf16.mxu0 0
    %433 = vmatpush1.bf16.msra.mxu0 %v349
    %434 = vmatprep.subr.bf16.mxu0 0
    %435 = vmatpush1.bf16.msra.mxu0 %v352
    %436 = vmatprep.subr.bf16.mxu0 0
    %437 = vmatpush1.bf16.msra.mxu0 0
    %438 = vmatprep.subr.bf16.mxu0 0
    %439 = vmatpush1.bf16.msra.mxu0 0
    %440 = vmatprep.subr.bf16.mxu0 0
    %441 = vmatpush1.bf16.msra.mxu0 0
    %442 = vmatprep.subr.bf16.mxu0 0
    %443 = vmatpush1.bf16.msra.mxu0 0
    %444 = vmatprep.subr.bf16.mxu0 0
    %445 = vmatpush1.bf16.msra.mxu0 0
    %446 = vmatprep.subr.bf16.mxu0 0
    %447 = vmatpush1.bf16.msra.mxu0 0
    %448 = vmatprep.subr.bf16.mxu0 0
    %449 = vmatpush1.bf16.msra.mxu0 0
    %450 = vmatprep.subr.bf16.mxu0 0
    %451 = vmatpush1.bf16.msra.mxu0 0
    %452 = vmatprep.mubr.bf16.mxu0 0
    %453 = vmatmul.mubr.bf16.gmra.mrb[0].mxu0 %v216
    %v454 = vpop.f32.mrb[0].mxu0
    %v455 = vadd.f32 0.0, %v454
    %v456 = vpop.f32.mrb[0].mxu0
    %v457 = vpop.f32.mrb[0].mxu0
    %v458 = vadd.f32 0.0, %v457
    %v459 = vpop.f32.mrb[0].mxu0
    %460 = vdwg.mxu0
    %v462 = vlaneseq
    %v463 = vshrl.u32 %v462, 7
    %v464 = vsub.s32 0, %v463
    %v465 = vrot.slane %v94, %v464
    %v467 = vadd.f32 %v412, %v465
    %v468 = vadd.f32 %v416, %v465
    %v469 = vld [vmem:[#allocation8] sm:$0xff]
    %v470 = vld [vmem:[#allocation8 + $0x8] sm:$0xff]
    %v471 = vld [vmem:[#allocation8 + $0x10] sm:$0xff]
    %v472 = vld [vmem:[#allocation8 + $0x18] sm:$0xff]
    %v473 = vld [vmem:[#allocation8 + $0x20] sm:$0xff]
    %v474 = vld [vmem:[#allocation8 + $0x28] sm:$0xff]
    %v475 = vld [vmem:[#allocation8 + $0x30] sm:$0xff]
    %v476 = vld [vmem:[#allocation8 + $0x38] sm:$0xff]
    %v477 = vld [vmem:[#allocation8 + $0x40] sm:$0xff]
    %v478 = vld [vmem:[#allocation8 + $0x48] sm:$0xff]
    %v479 = vld [vmem:[#allocation8 + $0x50] sm:$0xff]
    %v480 = vld [vmem:[#allocation8 + $0x58] sm:$0xff]
    %v481 = vld [vmem:[#allocation8 + $0x60] sm:$0xff]
    %v482 = vld [vmem:[#allocation8 + $0x68] sm:$0xff]
    %v483 = vld [vmem:[#allocation8 + $0x70] sm:$0xff]
    %v484 = vld [vmem:[#allocation8 + $0x78] sm:$0xff]
    %485 = vmatprep.subr.mxu0 0.0
    %486 = vmatpush1.msra.mxu0 %v469
    %487 = vmatprep.subr.mxu0 0.0
    %488 = vmatpush1.msra.mxu0 %v470
    %489 = vmatprep.subr.mxu0 0.0
    %490 = vmatpush1.msra.mxu0 %v471
    %491 = vmatprep.subr.mxu0 0.0
    %492 = vmatpush1.msra.mxu0 %v472
    %493 = vmatprep.subr.mxu0 0.0
    %494 = vmatpush1.msra.mxu0 %v473
    %495 = vmatprep.subr.mxu0 0.0
    %496 = vmatpush1.msra.mxu0 %v474
    %497 = vmatprep.subr.mxu0 0.0
    %498 = vmatpush1.msra.mxu0 %v475
    %499 = vmatprep.subr.mxu0 0.0
    %500 = vmatpush1.msra.mxu0 %v476
    %501 = vmatprep.subr.mxu0 0.0
    %502 = vmatpush1.msra.mxu0 %v477
    %503 = vmatprep.subr.mxu0 0.0
    %504 = vmatpush1.msra.mxu0 %v478
    %505 = vmatprep.subr.mxu0 0.0
    %506 = vmatpush1.msra.mxu0 %v479
    %507 = vmatprep.subr.mxu0 0.0
    %508 = vmatpush1.msra.mxu0 %v480
    %509 = vmatprep.subr.mxu0 0.0
    %510 = vmatpush1.msra.mxu0 %v481
    %511 = vmatprep.subr.mxu0 0.0
    %512 = vmatpush1.msra.mxu0 %v482
    %513 = vmatprep.subr.mxu0 0.0
    %514 = vmatpush1.msra.mxu0 %v483
    %515 = vmatprep.subr.mxu0 0.0
    %516 = vmatpush1.msra.mxu0 %v484
    %517 = vmatprep.subr.mxu0 0.0
    %518 = vmatpush1.msra.mxu0 0.0
    %519 = vmatprep.subr.mxu0 0.0
    %520 = vmatpush1.msra.mxu0 0.0
    %521 = vmatprep.subr.mxu0 0.0
    %522 = vmatpush1.msra.mxu0 0.0
    %523 = vmatprep.subr.mxu0 0.0
    %524 = vmatpush1.msra.mxu0 0.0
    %525 = vmatprep.subr.mxu0 0.0
    %526 = vmatpush1.msra.mxu0 0.0
    %527 = vmatprep.subr.mxu0 0.0
    %528 = vmatpush1.msra.mxu0 0.0
    %529 = vmatprep.subr.mxu0 0.0
    %530 = vmatpush1.msra.mxu0 0.0
    %531 = vmatprep.subr.mxu0 0.0
    %532 = vmatpush1.msra.mxu0 0.0
    %533 = vmatprep.subr.mxu0 0.0
    %534 = vmatpush1.msra.mxu0 0.0
    %535 = vmatprep.subr.mxu0 0.0
    %536 = vmatpush1.msra.mxu0 0.0
    %537 = vmatprep.subr.mxu0 0.0
    %538 = vmatpush1.msra.mxu0 0.0
    %539 = vmatprep.subr.mxu0 0.0
    %540 = vmatpush1.msra.mxu0 0.0
    %541 = vmatprep.subr.mxu0 0.0
    %542 = vmatpush1.msra.mxu0 0.0
    %543 = vmatprep.subr.mxu0 0.0
    %544 = vmatpush1.msra.mxu0 0.0
    %545 = vmatprep.subr.mxu0 0.0
    %546 = vmatpush1.msra.mxu0 0.0
    %547 = vmatprep.subr.mxu0 0.0
    %548 = vmatpush1.msra.mxu0 0.0
    %549 = vmatprep.mubr.f32.mxu0 0.0
    %550 = vmatmul.mubr.f32.gmra.mrb[0].mxu0 %v467
    %v551 = vpop.f32.mrb[0].mxu0
    %v552 = vadd.f32 0.0, %v551
    %v553 = vpop.f32.mrb[0].mxu0
    %554 = vmatprep.mubr.f32.mxu0 0.0
    %555 = vmatmul.mubr.f32.gmra.mrb[0].mxu0 %v468
    %v556 = vpop.f32.mrb[0].mxu0
    %v557 = vadd.f32 0.0, %v556
    %v558 = vpop.f32.mrb[0].mxu0
    %559 = vdwg.mxu0
    %v560 = vadd.f32 %v414, %v552
    %v561 = vadd.f32 %v418, %v557
    %v563 = vlaneseq
    %v564 = vshrl.u32 %v563, 7
    %v565 = vsub.s32 0, %v564
    %v566 = vrot.slane %v95, %v565
    %v568 = vadd.f32 %v560, %v566
    %v569 = vadd.f32 %v561, %v566
    %v570 = vld [vmem:[#allocation10] sm:$0xff]
    %v571 = vld [vmem:[#allocation10 + $0x8] sm:$0xff]
    %v572 = vld [vmem:[#allocation10 + $0x10] sm:$0xff]
    %v573 = vld [vmem:[#allocation10 + $0x18] sm:$0xff]
    %v574 = vld [vmem:[#allocation10 + $0x20] sm:$0xff]
    %v575 = vld [vmem:[#allocation10 + $0x28] sm:$0xff]
    %v576 = vld [vmem:[#allocation10 + $0x30] sm:$0xff]
    %v577 = vld [vmem:[#allocation10 + $0x38] sm:$0xff]
    %v578 = vld [vmem:[#allocation10 + $0x40] sm:$0xff]
    %v579 = vld [vmem:[#allocation10 + $0x48] sm:$0xff]
    %v580 = vld [vmem:[#allocation10 + $0x50] sm:$0xff]
    %v581 = vld [vmem:[#allocation10 + $0x58] sm:$0xff]
    %v582 = vld [vmem:[#allocation10 + $0x60] sm:$0xff]
    %v583 = vld [vmem:[#allocation10 + $0x68] sm:$0xff]
    %v584 = vld [vmem:[#allocation10 + $0x70] sm:$0xff]
    %v585 = vld [vmem:[#allocation10 + $0x78] sm:$0xff]
    %586 = vmatprep.subr.mxu0 0.0
    %587 = vmatpush1.msra.mxu0 %v570
    %588 = vmatprep.subr.mxu0 0.0
    %589 = vmatpush1.msra.mxu0 %v571
    %590 = vmatprep.subr.mxu0 0.0
    %591 = vmatpush1.msra.mxu0 %v572
    %592 = vmatprep.subr.mxu0 0.0
    %593 = vmatpush1.msra.mxu0 %v573
    %594 = vmatprep.subr.mxu0 0.0
    %595 = vmatpush1.msra.mxu0 %v574
    %596 = vmatprep.subr.mxu0 0.0
    %597 = vmatpush1.msra.mxu0 %v575
    %598 = vmatprep.subr.mxu0 0.0
    %599 = vmatpush1.msra.mxu0 %v576
    %600 = vmatprep.subr.mxu0 0.0
    %601 = vmatpush1.msra.mxu0 %v577
    %602 = vmatprep.subr.mxu0 0.0
    %603 = vmatpush1.msra.mxu0 %v578
    %604 = vmatprep.subr.mxu0 0.0
    %605 = vmatpush1.msra.mxu0 %v579
    %606 = vmatprep.subr.mxu0 0.0
    %607 = vmatpush1.msra.mxu0 %v580
    %608 = vmatprep.subr.mxu0 0.0
    %609 = vmatpush1.msra.mxu0 %v581
    %610 = vmatprep.subr.mxu0 0.0
    %611 = vmatpush1.msra.mxu0 %v582
    %612 = vmatprep.subr.mxu0 0.0
    %613 = vmatpush1.msra.mxu0 %v583
    %614 = vmatprep.subr.mxu0 0.0
    %615 = vmatpush1.msra.mxu0 %v584
    %616 = vmatprep.subr.mxu0 0.0
    %617 = vmatpush1.msra.mxu0 %v585
    %618 = vmatprep.subr.mxu0 0.0
    %619 = vmatpush1.msra.mxu0 0.0
    %620 = vmatprep.subr.mxu0 0.0
    %621 = vmatpush1.msra.mxu0 0.0
    %622 = vmatprep.subr.mxu0 0.0
    %623 = vmatpush1.msra.mxu0 0.0
    %624 = vmatprep.subr.mxu0 0.0
    %625 = vmatpush1.msra.mxu0 0.0
    %626 = vmatprep.subr.mxu0 0.0
    %627 = vmatpush1.msra.mxu0 0.0
    %628 = vmatprep.subr.mxu0 0.0
    %629 = vmatpush1.msra.mxu0 0.0
    %630 = vmatprep.subr.mxu0 0.0
    %631 = vmatpush1.msra.mxu0 0.0
    %632 = vmatprep.subr.mxu0 0.0
    %633 = vmatpush1.msra.mxu0 0.0
    %634 = vmatprep.subr.mxu0 0.0
    %635 = vmatpush1.msra.mxu0 0.0
    %636 = vmatprep.subr.mxu0 0.0
    %637 = vmatpush1.msra.mxu0 0.0
    %638 = vmatprep.subr.mxu0 0.0
    %639 = vmatpush1.msra.mxu0 0.0
    %640 = vmatprep.subr.mxu0 0.0
    %641 = vmatpush1.msra.mxu0 0.0
    %642 = vmatprep.subr.mxu0 0.0
    %643 = vmatpush1.msra.mxu0 0.0
    %644 = vmatprep.subr.mxu0 0.0
    %645 = vmatpush1.msra.mxu0 0.0
    %646 = vmatprep.subr.mxu0 0.0
    %647 = vmatpush1.msra.mxu0 0.0
    %648 = vmatprep.subr.mxu0 0.0
    %649 = vmatpush1.msra.mxu0 0.0
    %650 = vmatprep.mubr.f32.mxu0 0.0
    %651 = vmatmul.mubr.f32.gmra.mrb[0].mxu0 %v568
    %v652 = vpop.f32.mrb[0].mxu0
    %v653 = vadd.f32 0.0, %v652
    %v654 = vpop.f32.mrb[0].mxu0
    %655 = vmatprep.mubr.f32.mxu0 0.0
    %656 = vmatmul.mubr.f32.gmra.mrb[0].mxu0 %v569
    %v657 = vpop.f32.mrb[0].mxu0
    %v658 = vadd.f32 0.0, %v657
    %v659 = vpop.f32.mrb[0].mxu0
    %660 = vdwg.mxu0
    %v661 = vadd.f32 %v455, %v653
    %v662 = vadd.f32 %v458, %v658
    %v664 = vlaneseq
    %v665 = vshrl.u32 %v664, 7
    %v666 = vsub.s32 0, %v665
    %v667 = vrot.slane %v96, %v666
    %v669 = vadd.f32 %v661, %v667
    %v670 = vadd.f32 %v662, %v667
    %671 = vst [vmem:[#allocation11] sm:$0xff] %v467
    %672 = vst [vmem:[#allocation11 + $0x18] sm:$0xff] %v468
    %673 = vst [vmem:[#allocation11 + $0x8] sm:$0xff] %v568
    %674 = vst [vmem:[#allocation11 + $0x20] sm:$0xff] %v569
    %675 = vst [vmem:[#allocation11 + $0x10] sm:$0xff] %v669
    %676 = vst [vmem:[#allocation11 + $0x28] sm:$0xff] %v670
    // Predicated region
    $region46: #{tpu_custom_call.1} parent=1 // pred_check
      _
    $region47: #{tpu_custom_call.1} parent=1 // pred_check_branch
      %678 = sbr.rel (0) target = $region49
    $region48: #{tpu_custom_call.1} parent=1 // pred_region
      %s680 = ssub.s32 768, 768
      %681 = vsyncadd [#allocation4], %s680
      %s682 = sshll.u32 [#allocation11], 4
      %s683 = int_to_ptr.vmem [resolvable:$true] %s682
      %688 = dma.vmem_to_hbm [thread:$0]  %s683, 768, %s6, [#allocation4], 384, 384, 24
    $region49: #{tpu_custom_call.1} parent=1 // pred_fallthru
      _
    // Predicated region
    $region50: #{tpu_custom_call.1} parent=1 // pred_check
      _
    $region51: #{tpu_custom_call.1} parent=1 // pred_check_branch
      %690 = sbr.rel (0) target = $region53
    $region52: #{tpu_custom_call.1} parent=1 // pred_region
      %691 = dma.done [#allocation4], 768
    $region53: #{tpu_custom_call.1} parent=1 // pred_fallthru
      _
    %692 = vsyncpa [#allocation3], 1
    %693 = vsyncpa [#allocation6], 1
    %694 = vsyncpa [#allocation9], 1
    %695 = vsyncpa [#allocation4], 1

// kernel: tpu_custom_call.1
$region0: #{tpu_custom_call.1}
  #allocation0 [shape = 'u32[]', space=smem, size = 0x4, offset = 0x4, fixed_abs, tag = 'smem constant byte address 0x4 - core index']
  #allocation1 [shape = 'u32[144,128]{1,0:T(1,128)}', space=vmem, size = 0x12000, scoped, tag = 'internal scratch']
  %s0 = inlined_call_operand.hbm [shape: bf16[16,128], index: 0, kind: input, shape index: {}]
  %s1 = inlined_call_operand.hbm [shape: bf16[128,128], index: 1, kind: input, shape index: {}]
  %s2 = inlined_call_operand.hbm [shape: bf16[128,384], index: 2, kind: input, shape index: {}]
  %s3 = inlined_call_operand.hbm [shape: f32[128,128], index: 3, kind: input, shape index: {}]
  %s4 = inlined_call_operand.hbm [shape: f32[128,128], index: 4, kind: input, shape index: {}]
  %s5 = inlined_call_operand.vmem [shape: f32[1,512], index: 5, kind: input, shape index: {}]
  %s6 = inlined_call_operand.hbm [shape: f32[16,384], index: 6, kind: output, shape index: {}]
  %s7 = sld [smem:[#allocation0]]
  $region54: #{tpu_custom_call.1} parent=0
    _
  %s9 = ssub.s32 1, %s7
  %s10 = scalar_select 0, %s9, %s7
  $region1: #{tpu_custom_call.1} parent=0
    #allocation2 [shape = 'u8[4096]{0}', space=vmem, size = 0x1000, scoped, tag = 'input window, operand 0, single buffered']
    #allocation3 [shape = 's32[1]{0}', space=sflag, size = 0x4, scoped, tag = 'scoped memory for tpu_custom_call.1']
    #allocation4 [shape = 's32[1]{0}', space=sflag, size = 0x4, scoped, tag = 'scoped memory for tpu_custom_call.1']
    #allocation5 [shape = 'u8[32768]{0}', space=vmem, size = 0x8000, scoped, tag = 'input window, operand 1, single buffered']
    #allocation6 [shape = 's32[1]{0}', space=sflag, size = 0x4, scoped, tag = 'scoped memory for tpu_custom_call.1']
    #allocation7 [shape = 'u8[98304]{0}', space=vmem, size = 0x18000, scoped, tag = 'input window, operand 2, single buffered']
    #allocation8 [shape = 'u8[65536]{0}', space=vmem, size = 0x10000, scoped, tag = 'input window, operand 3, single buffered']
    #allocation9 [shape = 's32[1]{0}', space=sflag, size = 0x4, scoped, tag = 'scoped memory for tpu_custom_call.1']
    #allocation10 [shape = 'u8[65536]{0}', space=vmem, size = 0x10000, scoped, tag = 'input window, operand 4, single buffered']
    #allocation11 [shape = 'u8[24576]{0}', space=vmem, size = 0x6000, scoped, tag = 'output window, operand 0, single buffered']
    %11 = vsyncpa [#allocation3], 0
    %12 = vsyncpa [#allocation6], 0
    %13 = vsyncpa [#allocation9], 0
    %14 = vsyncpa [#allocation4], 0
    // Predicated region
    $region2: #{tpu_custom_call.1} parent=1 // pred_check
      _
    $region3: #{tpu_custom_call.1} parent=1 // pred_check_branch
      %16 = sbr.rel (0) target = $region5
    $region4: #{tpu_custom_call.1} parent=1 // pred_region
      %s18 = ssub.s32 128, 128
      %19 = vsyncadd [#allocation3], %s18
      %s20 = sshll.u32 [#allocation2], 4
      %s21 = int_to_ptr.vmem [resolvable:$true] %s20
      %26 = dma.hbm_to_vmem [thread:$0]  %s0, 128, %s21, [#allocation3], 64, 64, 4
    $region5: #{tpu_custom_call.1} parent=1 // pred_fallthru
      _
    // Predicated region
    $region6: #{tpu_custom_call.1} parent=1 // pred_check
      _
    $region7: #{tpu_custom_call.1} parent=1 // pred_check_branch
      %28 = sbr.rel (0) target = $region9
    $region8: #{tpu_custom_call.1} parent=1 // pred_region
      %s30 = ssub.s32 1024, 1024
      %31 = vsyncadd [#allocation6], %s30
      %s32 = sshll.u32 [#allocation5], 4
      %s33 = int_to_ptr.vmem [resolvable:$true] %s32
      %38 = dma.hbm_to_vmem [thread:$0]  %s1, 1024, %s33, [#allocation6], 64, 64, 4
    $region9: #{tpu_custom_call.1} parent=1 // pred_fallthru
      _
    // Predicated region
    $region10: #{tpu_custom_call.1} parent=1 // pred_check
      _
    $region11: #{tpu_custom_call.1} parent=1 // pred_check_branch
      %40 = sbr.rel (0) target = $region13
    $region12: #{tpu_custom_call.1} parent=1 // pred_region
      %s42 = ssub.s32 3072, 3072
      %43 = vsyncadd [#allocation6], %s42
      %s44 = sshll.u32 [#allocation7], 4
      %s45 = int_to_ptr.vmem [resolvable:$true] %s44
      %50 = dma.hbm_to_vmem [thread:$0]  %s2, 3072, %s45, [#allocation6], 192, 192, 12
    $region13: #{tpu_custom_call.1} parent=1 // pred_fallthru
      _
    // Predicated region
    $region14: #{tpu_custom_call.1} parent=1 // pred_check
      _
    $region15: #{tpu_custom_call.1} parent=1 // pred_check_branch
      %52 = sbr.rel (0) target = $region17
    $region16: #{tpu_custom_call.1} parent=1 // pred_region
      %s54 = ssub.s32 2048, 2048
      %55 = vsyncadd [#allocation9], %s54
      %s56 = sshll.u32 [#allocation8], 4
      %s57 = int_to_ptr.vmem [resolvable:$true] %s56
      %62 = dma.hbm_to_vmem [thread:$0]  %s3, 2048, %s57, [#allocation9], 128, 128, 8
    $region17: #{tpu_custom_call.1} parent=1 // pred_fallthru
      _
    // Predicated region
    $region18: #{tpu_custom_call.1} parent=1 // pred_check
      _
    $region19: #{tpu_custom_call.1} parent=1 // pred_check_branch
      %64 = sbr.rel (0) target = $region21
    $region20: #{tpu_custom_call.1} parent=1 // pred_region
      %s66 = ssub.s32 2048, 2048
      %67 = vsyncadd [#allocation9], %s66
      %s68 = sshll.u32 [#allocation10], 4
      %s69 = int_to_ptr.vmem [resolvable:$true] %s68
      %74 = dma.hbm_to_vmem [thread:$0]  %s4, 2048, %s69, [#allocation9], 128, 128, 8
    $region21: #{tpu_custom_call.1} parent=1 // pred_fallthru
      _
    // Predicated region
    $region22: #{tpu_custom_call.1} parent=1 // pred_check
      _
    $region23: #{tpu_custom_call.1} parent=1 // pred_check_branch
      %76 = sbr.rel (0) target = $region25
    $region24: #{tpu_custom_call.1} parent=1 // pred_region
      _
    $region25: #{tpu_custom_call.1} parent=1 // pred_fallthru
      _
    // Predicated region
    $region26: #{tpu_custom_call.1} parent=1 // pred_check
      _
    $region27: #{tpu_custom_call.1} parent=1 // pred_check_branch
      %78 = sbr.rel (0) target = $region29
    $region28: #{tpu_custom_call.1} parent=1 // pred_region
      %79 = dma.done [#allocation3], 128
    $region29: #{tpu_custom_call.1} parent=1 // pred_fallthru
      _
    // Predicated region
    $region30: #{tpu_custom_call.1} parent=1 // pred_check
      _
    $region31: #{tpu_custom_call.1} parent=1 // pred_check_branch
      %81 = sbr.rel (0) target = $region33
    $region32: #{tpu_custom_call.1} parent=1 // pred_region
      %82 = dma.done [#allocation6], 1024
    $region33: #{tpu_custom_call.1} parent=1 // pred_fallthru
      _
    // Predicated region
    $region34: #{tpu_custom_call.1} parent=1 // pred_check
      _
    $region35: #{tpu_custom_call.1} parent=1 // pred_check_branch
      %84 = sbr.rel (0) target = $region37
    $region36: #{tpu_custom_call.1} parent=1 // pred_region
      %85 = dma.done [#allocation6], 3072
    $region37: #{tpu_custom_call.1} parent=1 // pred_fallthru
      _
    // Predicated region
    $region38: #{tpu_custom_call.1} parent=1 // pred_check
      _
    $region39: #{tpu_custom_call.1} parent=1 // pred_check_branch
      %87 = sbr.rel (0) target = $region41
    $region40: #{tpu_custom_call.1} parent=1 // pred_region
      %88 = dma.done [#allocation9], 2048
    $region41: #{tpu_custom_call.1} parent=1 // pred_fallthru
      _
    // Predicated region
    $region42: #{tpu_custom_call.1} parent=1 // pred_check
      _
    $region43: #{tpu_custom_call.1} parent=1 // pred_check_branch
      %90 = sbr.rel (0) target = $region45
    $region44: #{tpu_custom_call.1} parent=1 // pred_region
      %91 = dma.done [#allocation9], 2048
    $region45: #{tpu_custom_call.1} parent=1 // pred_fallthru
      _
    %v93 = vld [vmem:[%s5] sm:$0x1]
    %v94 = vld [vmem:[%s5 + $0x1] sm:$0x1]
    %v95 = vld [vmem:[%s5 + $0x2] sm:$0x1]
    %v96 = vld [vmem:[%s5 + $0x3] sm:$0x1]
    %v97 = vld [vmem:[#allocation2] sm:$0xf]
    %v98 = vld [vmem:[#allocation2 + $0x4] sm:$0xf]
    %v99 = vld [vmem:[#allocation5] sm:$0xf]
    %v100 = vld [vmem:[#allocation5 + $0x4] sm:$0xf]
    %v101 = vld [vmem:[#allocation5 + $0x8] sm:$0xf]
    %v102 = vld [vmem:[#allocation5 + $0xc] sm:$0xf]
    %v103 = vld [vmem:[#allocation5 + $0x10] sm:$0xf]
    %v104 = vld [vmem:[#allocation5 + $0x14] sm:$0xf]
    %v105 = vld [vmem:[#allocation5 + $0x18] sm:$0xf]
    %v106 = vld [vmem:[#allocation5 + $0x1c] sm:$0xf]
    %v107 = vld [vmem:[#allocation5 + $0x20] sm:$0xf]
    %v108 = vld [vmem:[#allocation5 + $0x24] sm:$0xf]
    %v109 = vld [vmem:[#allocation5 + $0x28] sm:$0xf]
    %v110 = vld [vmem:[#allocation5 + $0x2c] sm:$0xf]
    %v111 = vld [vmem:[#allocation5 + $0x30] sm:$0xf]
    %v112 = vld [vmem:[#allocation5 + $0x34] sm:$0xf]
    %v113 = vld [vmem:[#allocation5 + $0x38] sm:$0xf]
    %v114 = vld [vmem:[#allocation5 + $0x3c] sm:$0xf]
    %v116 = vlaneseq
    %v117 = vshrl.u32 %v116, 7
    %v118 = vsub.s32 0, %v117
    %v119 = vrot.slane %v93, %v118
    %v123 = vunpack.c.l.b16 %v97
    %v124 = vunpack.c.l.b16 %v98
    %v125 = vpack.c.b16 %v124, %v123
    %v143 = vunpack.c.l.b16 %v99
    %v144 = vunpack.c.l.b16 %v100
    %v145 = vunpack.c.l.b16 %v101
    %v146 = vunpack.c.l.b16 %v102
    %v147 = vunpack.c.l.b16 %v103
    %v148 = vunpack.c.l.b16 %v104
    %v149 = vunpack.c.l.b16 %v105
    %v150 = vunpack.c.l.b16 %v106
    %v151 = vunpack.c.l.b16 %v107
    %v152 = vunpack.c.l.b16 %v108
    %v153 = vunpack.c.l.b16 %v109
    %v154 = vunpack.c.l.b16 %v110
    %v155 = vunpack.c.l.b16 %v111
    %v156 = vunpack.c.l.b16 %v112
    %v157 = vunpack.c.l.b16 %v113
    %v158 = vunpack.c.l.b16 %v114
    %v159 = vpack.c.b16 %v144, %v143
    %v160 = vpack.c.b16 %v146, %v145
    %v161 = vpack.c.b16 %v148, %v147
    %v162 = vpack.c.b16 %v150, %v149
    %v163 = vpack.c.b16 %v152, %v151
    %v164 = vpack.c.b16 %v154, %v153
    %v165 = vpack.c.b16 %v156, %v155
    %v166 = vpack.c.b16 %v158, %v157
    %175 = vmatprep.subr.bf16.mxu0 0
    %176 = vmatpush1.bf16.msra.mxu0 %v159
    %177 = vmatprep.subr.bf16.mxu0 0
    %178 = vmatpush1.bf16.msra.mxu0 %v160
    %179 = vmatprep.subr.bf16.mxu0 0
    %180 = vmatpush1.bf16.msra.mxu0 %v161
    %181 = vmatprep.subr.bf16.mxu0 0
    %182 = vmatpush1.bf16.msra.mxu0 %v162
    %183 = vmatprep.subr.bf16.mxu0 0
    %184 = vmatpush1.bf16.msra.mxu0 %v163
    %185 = vmatprep.subr.bf16.mxu0 0
    %186 = vmatpush1.bf16.msra.mxu0 %v164
    %187 = vmatprep.subr.bf16.mxu0 0
    %188 = vmatpush1.bf16.msra.mxu0 %v165
    %189 = vmatprep.subr.bf16.mxu0 0
    %190 = vmatpush1.bf16.msra.mxu0 %v166
    %191 = vmatprep.subr.bf16.mxu0 0
    %192 = vmatpush1.bf16.msra.mxu0 0
    %193 = vmatprep.subr.bf16.mxu0 0
    %194 = vmatpush1.bf16.msra.mxu0 0
    %195 = vmatprep.subr.bf16.mxu0 0
    %196 = vmatpush1.bf16.msra.mxu0 0
    %197 = vmatprep.subr.bf16.mxu0 0
    %198 = vmatpush1.bf16.msra.mxu0 0
    %199 = vmatprep.subr.bf16.mxu0 0
    %200 = vmatpush1.bf16.msra.mxu0 0
    %201 = vmatprep.subr.bf16.mxu0 0
    %202 = vmatpush1.bf16.msra.mxu0 0
    %203 = vmatprep.subr.bf16.mxu0 0
    %204 = vmatpush1.bf16.msra.mxu0 0
    %205 = vmatprep.subr.bf16.mxu0 0
    %206 = vmatpush1.bf16.msra.mxu0 0
    %207 = vmatprep.mubr.bf16.mxu0 0
    %208 = vmatmul.mubr.bf16.gmra.mrb[0].mxu0 %v125
    %v209 = vpop.f32.mrb[0].mxu0
    %v210 = vadd.f32 %v119, %v209
    %v211 = vpop.f32.mrb[0].mxu0
    %v212 = vpop.f32.mrb[0].mxu0
    %v213 = vadd.f32 %v119, %v212
    %v214 = vpop.f32.mrb[0].mxu0
    %215 = vdwg.mxu0
    %v216 = vpack.c.bf16 %v213, %v210
    %v217 = vld [vmem:[#allocation7] sm:$0xff]
    %v218 = vld [vmem:[#allocation7 + $0x8] sm:$0xf]
    %v219 = vld [vmem:[#allocation7 + $0xc] sm:$0xff]
    %v220 = vld [vmem:[#allocation7 + $0x14] sm:$0xf]
    %v221 = vld [vmem:[#allocation7 + $0x18] sm:$0xff]
    %v222 = vld [vmem:[#allocation7 + $0x20] sm:$0xf]
    %v223 = vld [vmem:[#allocation7 + $0x24] sm:$0xff]
    %v224 = vld [vmem:[#allocation7 + $0x2c] sm:$0xf]
    %v225 = vld [vmem:[#allocation7 + $0x30] sm:$0xff]
    %v226 = vld [vmem:[#allocation7 + $0x38] sm:$0xf]
    %v227 = vld [vmem:[#allocation7 + $0x3c] sm:$0xff]
    %v228 = vld [vmem:[#allocation7 + $0x44] sm:$0xf]
    %v229 = vld [vmem:[#allocation7 + $0x48] sm:$0xff]
    %v230 = vld [vmem:[#allocation7 + $0x50] sm:$0xf]
    %v231 = vld [vmem:[#allocation7 + $0x54] sm:$0xff]
    %v232 = vld [vmem:[#allocation7 + $0x5c] sm:$0xf]
    %v233 = vld [vmem:[#allocation7 + $0x60] sm:$0xff]
    %v234 = vld [vmem:[#allocation7 + $0x68] sm:$0xf]
    %v235 = vld [vmem:[#allocation7 + $0x6c] sm:$0xff]
    %v236 = vld [vmem:[#allocation7 + $0x74] sm:$0xf]
    %v237 = vld [vmem:[#allocation7 + $0x78] sm:$0xff]
    %v238 = vld [vmem:[#allocation7 + $0x80] sm:$0xf]
    %v239 = vld [vmem:[#allocation7 + $0x84] sm:$0xff]
    %v240 = vld [vmem:[#allocation7 + $0x8c] sm:$0xf]
    %v241 = vld [vmem:[#allocation7 + $0x90] sm:$0xff]
    %v242 = vld [vmem:[#allocation7 + $0x98] sm:$0xf]
    %v243 = vld [vmem:[#allocation7 + $0x9c] sm:$0xff]
    %v244 = vld [vmem:[#allocation7 + $0xa4] sm:$0xf]
    %v245 = vld [vmem:[#allocation7 + $0xa8] sm:$0xff]
    %v246 = vld [vmem:[#allocation7 + $0xb0] sm:$0xf]
    %v247 = vld [vmem:[#allocation7 + $0xb4] sm:$0xff]
    %v248 = vld [vmem:[#allocation7 + $0xbc] sm:$0xf]
    %v281 = vunpack.c.l.b16 %v217
    %v282 = vunpack.c.h.b16 %v217
    %v283 = vunpack.c.l.b16 %v218
    %v284 = vunpack.c.l.b16 %v219
    %v285 = vunpack.c.h.b16 %v219
    %v286 = vunpack.c.l.b16 %v220
    %v287 = vunpack.c.l.b16 %v221
    %v288 = vunpack.c.h.b16 %v221
    %v289 = vunpack.c.l.b16 %v222
    %v290 = vunpack.c.l.b16 %v223
    %v291 = vunpack.c.h.b16 %v223
    %v292 = vunpack.c.l.b16 %v224
    %v293 = vunpack.c.l.b16 %v225
    %v294 = vunpack.c.h.b16 %v225
    %v295 = vunpack.c.l.b16 %v226
    %v296 = vunpack.c.l.b16 %v227
    %v297 = vunpack.c.h.b16 %v227
    %v298 = vunpack.c.l.b16 %v228
    %v299 = vunpack.c.l.b16 %v229
    %v300 = vunpack.c.h.b16 %v229
    %v301 = vunpack.c.l.b16 %v230
    %v302 = vunpack.c.l.b16 %v231
    %v303 = vunpack.c.h.b16 %v231
    %v304 = vunpack.c.l.b16 %v232
    %v305 = vunpack.c.l.b16 %v233
    %v306 = vunpack.c.h.b16 %v233
    %v307 = vunpack.c.l.b16 %v234
    %v308 = vunpack.c.l.b16 %v235
    %v309 = vunpack.c.h.b16 %v235
    %v310 = vunpack.c.l.b16 %v236
    %v311 = vunpack.c.l.b16 %v237
    %v312 = vunpack.c.h.b16 %v237
    %v313 = vunpack.c.l.b16 %v238
    %v314 = vunpack.c.l.b16 %v239
    %v315 = vunpack.c.h.b16 %v239
    %v316 = vunpack.c.l.b16 %v240
    %v317 = vunpack.c.l.b16 %v241
    %v318 = vunpack.c.h.b16 %v241
    %v319 = vunpack.c.l.b16 %v242
    %v320 = vunpack.c.l.b16 %v243
    %v321 = vunpack.c.h.b16 %v243
    %v322 = vunpack.c.l.b16 %v244
    %v323 = vunpack.c.l.b16 %v245
    %v324 = vunpack.c.h.b16 %v245
    %v325 = vunpack.c.l.b16 %v246
    %v326 = vunpack.c.l.b16 %v247
    %v327 = vunpack.c.h.b16 %v247
    %v328 = vunpack.c.l.b16 %v248
    %v329 = vpack.c.b16 %v284, %v281
    %v330 = vpack.c.b16 %v285, %v282
    %v331 = vpack.c.b16 %v286, %v283
    %v332 = vpack.c.b16 %v290, %v287
    %v333 = vpack.c.b16 %v291, %v288
    %v334 = vpack.c.b16 %v292, %v289
    %v335 = vpack.c.b16 %v296, %v293
    %v336 = vpack.c.b16 %v297, %v294
    %v337 = vpack.c.b16 %v298, %v295
    %v338 = vpack.c.b16 %v302, %v299
    %v339 = vpack.c.b16 %v303, %v300
    %v340 = vpack.c.b16 %v304, %v301
    %v341 = vpack.c.b16 %v308, %v305
    %v342 = vpack.c.b16 %v309, %v306
    %v343 = vpack.c.b16 %v310, %v307
    %v344 = vpack.c.b16 %v314, %v311
    %v345 = vpack.c.b16 %v315, %v312
    %v346 = vpack.c.b16 %v316, %v313
    %v347 = vpack.c.b16 %v320, %v317
    %v348 = vpack.c.b16 %v321, %v318
    %v349 = vpack.c.b16 %v322, %v319
    %v350 = vpack.c.b16 %v326, %v323
    %v351 = vpack.c.b16 %v327, %v324
    %v352 = vpack.c.b16 %v328, %v325
    %377 = vmatprep.subr.bf16.mxu0 %v330
    %378 = vmatpush1.bf16.msra.mxu0 %v329
    %379 = vmatprep.subr.bf16.mxu0 %v333
    %380 = vmatpush1.bf16.msra.mxu0 %v332
    %381 = vmatprep.subr.bf16.mxu0 %v336
    %382 = vmatpush1.bf16.msra.mxu0 %v335
    %383 = vmatprep.subr.bf16.mxu0 %v339
    %384 = vmatpush1.bf16.msra.mxu0 %v338
    %385 = vmatprep.subr.bf16.mxu0 %v342
    %386 = vmatpush1.bf16.msra.mxu0 %v341
    %387 = vmatprep.subr.bf16.mxu0 %v345
    %388 = vmatpush1.bf16.msra.mxu0 %v344
    %389 = vmatprep.subr.bf16.mxu0 %v348
    %390 = vmatpush1.bf16.msra.mxu0 %v347
    %391 = vmatprep.subr.bf16.mxu0 %v351
    %392 = vmatpush1.bf16.msra.mxu0 %v350
    %393 = vmatprep.subr.bf16.mxu0 0
    %394 = vmatpush1.bf16.msra.mxu0 0
    %395 = vmatprep.subr.bf16.mxu0 0
    %396 = vmatpush1.bf16.msra.mxu0 0
    %397 = vmatprep.subr.bf16.mxu0 0
    %398 = vmatpush1.bf16.msra.mxu0 0
    %399 = vmatprep.subr.bf16.mxu0 0
    %400 = vmatpush1.bf16.msra.mxu0 0
    %401 = vmatprep.subr.bf16.mxu0 0
    %402 = vmatpush1.bf16.msra.mxu0 0
    %403 = vmatprep.subr.bf16.mxu0 0
    %404 = vmatpush1.bf16.msra.mxu0 0
    %405 = vmatprep.subr.bf16.mxu0 0
    %406 = vmatpush1.bf16.msra.mxu0 0
    %407 = vmatprep.subr.bf16.mxu0 0
    %408 = vmatpush1.bf16.msra.mxu0 0
    %409 = vmatprep.mubr.bf16.mxu0 0
    %410 = vmatmul.mubr.bf16.gmra.mrb[0].mxu0 %v216
    %v411 = vpop.f32.mrb[0].mxu0
    %v412 = vadd.f32 0.0, %v411
    %v413 = vpop.f32.mrb[0].mxu0
    %v414 = vadd.f32 0.0, %v413
    %v415 = vpop.f32.mrb[0].mxu0
    %v416 = vadd.f32 0.0, %v415
    %v417 = vpop.f32.mrb[0].mxu0
    %v418 = vadd.f32 0.0, %v417
    %419 = vdwg.mxu0
    %420 = vmatprep.subr.bf16.mxu0 0
    %421 = vmatpush1.bf16.msra.mxu0 %v331
    %422 = vmatprep.subr.bf16.mxu0 0
    %423 = vmatpush1.bf16.msra.mxu0 %v334
    %424 = vmatprep.subr.bf16.mxu0 0
    %425 = vmatpush1.bf16.msra.mxu0 %v337
    %426 = vmatprep.subr.bf16.mxu0 0
    %427 = vmatpush1.bf16.msra.mxu0 %v340
    %428 = vmatprep.subr.bf16.mxu0 0
    %429 = vmatpush1.bf16.msra.mxu0 %v343
    %430 = vmatprep.subr.bf16.mxu0 0
    %431 = vmatpush1.bf16.msra.mxu0 %v346
    %432 = vmatprep.subr.bf16.mxu0 0
    %433 = vmatpush1.bf16.msra.mxu0 %v349
    %434 = vmatprep.subr.bf16.mxu0 0
    %435 = vmatpush1.bf16.msra.mxu0 %v352
    %436 = vmatprep.subr.bf16.mxu0 0
    %437 = vmatpush1.bf16.msra.mxu0 0
    %438 = vmatprep.subr.bf16.mxu0 0
    %439 = vmatpush1.bf16.msra.mxu0 0
    %440 = vmatprep.subr.bf16.mxu0 0
    %441 = vmatpush1.bf16.msra.mxu0 0
    %442 = vmatprep.subr.bf16.mxu0 0
    %443 = vmatpush1.bf16.msra.mxu0 0
    %444 = vmatprep.subr.bf16.mxu0 0
    %445 = vmatpush1.bf16.msra.mxu0 0
    %446 = vmatprep.subr.bf16.mxu0 0
    %447 = vmatpush1.bf16.msra.mxu0 0
    %448 = vmatprep.subr.bf16.mxu0 0
    %449 = vmatpush1.bf16.msra.mxu0 0
    %450 = vmatprep.subr.bf16.mxu0 0
    %451 = vmatpush1.bf16.msra.mxu0 0
    %452 = vmatprep.mubr.bf16.mxu0 0
    %453 = vmatmul.mubr.bf16.gmra.mrb[0].mxu0 %v216
    %v454 = vpop.f32.mrb[0].mxu0
    %v455 = vadd.f32 0.0, %v454
    %v456 = vpop.f32.mrb[0].mxu0
    %v457 = vpop.f32.mrb[0].mxu0
    %v458 = vadd.f32 0.0, %v457
    %v459 = vpop.f32.mrb[0].mxu0
    %460 = vdwg.mxu0
    %v462 = vlaneseq
    %v463 = vshrl.u32 %v462, 7
    %v464 = vsub.s32 0, %v463
    %v465 = vrot.slane %v94, %v464
    %v467 = vadd.f32 %v412, %v465
    %v468 = vadd.f32 %v416, %v465
    %v469 = vld [vmem:[#allocation8] sm:$0xff]
    %v470 = vld [vmem:[#allocation8 + $0x8] sm:$0xff]
    %v471 = vld [vmem:[#allocation8 + $0x10] sm:$0xff]
    %v472 = vld [vmem:[#allocation8 + $0x18] sm:$0xff]
    %v473 = vld [vmem:[#allocation8 + $0x20] sm:$0xff]
    %v474 = vld [vmem:[#allocation8 + $0x28] sm:$0xff]
    %v475 = vld [vmem:[#allocation8 + $0x30] sm:$0xff]
    %v476 = vld [vmem:[#allocation8 + $0x38] sm:$0xff]
    %v477 = vld [vmem:[#allocation8 + $0x40] sm:$0xff]
    %v478 = vld [vmem:[#allocation8 + $0x48] sm:$0xff]
    %v479 = vld [vmem:[#allocation8 + $0x50] sm:$0xff]
    %v480 = vld [vmem:[#allocation8 + $0x58] sm:$0xff]
    %v481 = vld [vmem:[#allocation8 + $0x60] sm:$0xff]
    %v482 = vld [vmem:[#allocation8 + $0x68] sm:$0xff]
    %v483 = vld [vmem:[#allocation8 + $0x70] sm:$0xff]
    %v484 = vld [vmem:[#allocation8 + $0x78] sm:$0xff]
    %485 = vmatprep.subr.mxu0 0.0
    %486 = vmatpush1.msra.mxu0 %v469
    %487 = vmatprep.subr.mxu0 0.0
    %488 = vmatpush1.msra.mxu0 %v470
    %489 = vmatprep.subr.mxu0 0.0
    %490 = vmatpush1.msra.mxu0 %v471
    %491 = vmatprep.subr.mxu0 0.0
    %492 = vmatpush1.msra.mxu0 %v472
    %493 = vmatprep.subr.mxu0 0.0
    %494 = vmatpush1.msra.mxu0 %v473
    %495 = vmatprep.subr.mxu0 0.0
    %496 = vmatpush1.msra.mxu0 %v474
    %497 = vmatprep.subr.mxu0 0.0
    %498 = vmatpush1.msra.mxu0 %v475
    %499 = vmatprep.subr.mxu0 0.0
    %500 = vmatpush1.msra.mxu0 %v476
    %501 = vmatprep.subr.mxu0 0.0
    %502 = vmatpush1.msra.mxu0 %v477
    %503 = vmatprep.subr.mxu0 0.0
    %504 = vmatpush1.msra.mxu0 %v478
    %505 = vmatprep.subr.mxu0 0.0
    %506 = vmatpush1.msra.mxu0 %v479
    %507 = vmatprep.subr.mxu0 0.0
    %508 = vmatpush1.msra.mxu0 %v480
    %509 = vmatprep.subr.mxu0 0.0
    %510 = vmatpush1.msra.mxu0 %v481
    %511 = vmatprep.subr.mxu0 0.0
    %512 = vmatpush1.msra.mxu0 %v482
    %513 = vmatprep.subr.mxu0 0.0
    %514 = vmatpush1.msra.mxu0 %v483
    %515 = vmatprep.subr.mxu0 0.0
    %516 = vmatpush1.msra.mxu0 %v484
    %517 = vmatprep.subr.mxu0 0.0
    %518 = vmatpush1.msra.mxu0 0.0
    %519 = vmatprep.subr.mxu0 0.0
    %520 = vmatpush1.msra.mxu0 0.0
    %521 = vmatprep.subr.mxu0 0.0
    %522 = vmatpush1.msra.mxu0 0.0
    %523 = vmatprep.subr.mxu0 0.0
    %524 = vmatpush1.msra.mxu0 0.0
    %525 = vmatprep.subr.mxu0 0.0
    %526 = vmatpush1.msra.mxu0 0.0
    %527 = vmatprep.subr.mxu0 0.0
    %528 = vmatpush1.msra.mxu0 0.0
    %529 = vmatprep.subr.mxu0 0.0
    %530 = vmatpush1.msra.mxu0 0.0
    %531 = vmatprep.subr.mxu0 0.0
    %532 = vmatpush1.msra.mxu0 0.0
    %533 = vmatprep.subr.mxu0 0.0
    %534 = vmatpush1.msra.mxu0 0.0
    %535 = vmatprep.subr.mxu0 0.0
    %536 = vmatpush1.msra.mxu0 0.0
    %537 = vmatprep.subr.mxu0 0.0
    %538 = vmatpush1.msra.mxu0 0.0
    %539 = vmatprep.subr.mxu0 0.0
    %540 = vmatpush1.msra.mxu0 0.0
    %541 = vmatprep.subr.mxu0 0.0
    %542 = vmatpush1.msra.mxu0 0.0
    %543 = vmatprep.subr.mxu0 0.0
    %544 = vmatpush1.msra.mxu0 0.0
    %545 = vmatprep.subr.mxu0 0.0
    %546 = vmatpush1.msra.mxu0 0.0
    %547 = vmatprep.subr.mxu0 0.0
    %548 = vmatpush1.msra.mxu0 0.0
    %549 = vmatprep.mubr.f32.mxu0 0.0
    %550 = vmatmul.mubr.f32.gmra.mrb[0].mxu0 %v467
    %v551 = vpop.f32.mrb[0].mxu0
    %v552 = vadd.f32 0.0, %v551
    %v553 = vpop.f32.mrb[0].mxu0
    %554 = vmatprep.mubr.f32.mxu0 0.0
    %555 = vmatmul.mubr.f32.gmra.mrb[0].mxu0 %v468
    %v556 = vpop.f32.mrb[0].mxu0
    %v557 = vadd.f32 0.0, %v556
    %v558 = vpop.f32.mrb[0].mxu0
    %559 = vdwg.mxu0
    %v560 = vadd.f32 %v414, %v552
    %v561 = vadd.f32 %v418, %v557
    %v563 = vlaneseq
    %v564 = vshrl.u32 %v563, 7
    %v565 = vsub.s32 0, %v564
    %v566 = vrot.slane %v95, %v565
    %v568 = vadd.f32 %v560, %v566
    %v569 = vadd.f32 %v561, %v566
    %v570 = vld [vmem:[#allocation10] sm:$0xff]
    %v571 = vld [vmem:[#allocation10 + $0x8] sm:$0xff]
    %v572 = vld [vmem:[#allocation10 + $0x10] sm:$0xff]
    %v573 = vld [vmem:[#allocation10 + $0x18] sm:$0xff]
    %v574 = vld [vmem:[#allocation10 + $0x20] sm:$0xff]
    %v575 = vld [vmem:[#allocation10 + $0x28] sm:$0xff]
    %v576 = vld [vmem:[#allocation10 + $0x30] sm:$0xff]
    %v577 = vld [vmem:[#allocation10 + $0x38] sm:$0xff]
    %v578 = vld [vmem:[#allocation10 + $0x40] sm:$0xff]
    %v579 = vld [vmem:[#allocation10 + $0x48] sm:$0xff]
    %v580 = vld [vmem:[#allocation10 + $0x50] sm:$0xff]
    %v581 = vld [vmem:[#allocation10 + $0x58] sm:$0xff]
    %v582 = vld [vmem:[#allocation10 + $0x60] sm:$0xff]
    %v583 = vld [vmem:[#allocation10 + $0x68] sm:$0xff]
    %v584 = vld [vmem:[#allocation10 + $0x70] sm:$0xff]
    %v585 = vld [vmem:[#allocation10 + $0x78] sm:$0xff]
    %586 = vmatprep.subr.mxu0 0.0
    %587 = vmatpush1.msra.mxu0 %v570
    %588 = vmatprep.subr.mxu0 0.0
    %589 = vmatpush1.msra.mxu0 %v571
    %590 = vmatprep.subr.mxu0 0.0
    %591 = vmatpush1.msra.mxu0 %v572
    %592 = vmatprep.subr.mxu0 0.0
    %593 = vmatpush1.msra.mxu0 %v573
    %594 = vmatprep.subr.mxu0 0.0
    %595 = vmatpush1.msra.mxu0 %v574
    %596 = vmatprep.subr.mxu0 0.0
    %597 = vmatpush1.msra.mxu0 %v575
    %598 = vmatprep.subr.mxu0 0.0
    %599 = vmatpush1.msra.mxu0 %v576
    %600 = vmatprep.subr.mxu0 0.0
    %601 = vmatpush1.msra.mxu0 %v577
    %602 = vmatprep.subr.mxu0 0.0
    %603 = vmatpush1.msra.mxu0 %v578
    %604 = vmatprep.subr.mxu0 0.0
    %605 = vmatpush1.msra.mxu0 %v579
    %606 = vmatprep.subr.mxu0 0.0
    %607 = vmatpush1.msra.mxu0 %v580
    %608 = vmatprep.subr.mxu0 0.0
    %609 = vmatpush1.msra.mxu0 %v581
    %610 = vmatprep.subr.mxu0 0.0
    %611 = vmatpush1.msra.mxu0 %v582
    %612 = vmatprep.subr.mxu0 0.0
    %613 = vmatpush1.msra.mxu0 %v583
    %614 = vmatprep.subr.mxu0 0.0
    %615 = vmatpush1.msra.mxu0 %v584
    %616 = vmatprep.subr.mxu0 0.0
    %617 = vmatpush1.msra.mxu0 %v585
    %618 = vmatprep.subr.mxu0 0.0
    %619 = vmatpush1.msra.mxu0 0.0
    %620 = vmatprep.subr.mxu0 0.0
    %621 = vmatpush1.msra.mxu0 0.0
    %622 = vmatprep.subr.mxu0 0.0
    %623 = vmatpush1.msra.mxu0 0.0
    %624 = vmatprep.subr.mxu0 0.0
    %625 = vmatpush1.msra.mxu0 0.0
    %626 = vmatprep.subr.mxu0 0.0
    %627 = vmatpush1.msra.mxu0 0.0
    %628 = vmatprep.subr.mxu0 0.0
    %629 = vmatpush1.msra.mxu0 0.0
    %630 = vmatprep.subr.mxu0 0.0
    %631 = vmatpush1.msra.mxu0 0.0
    %632 = vmatprep.subr.mxu0 0.0
    %633 = vmatpush1.msra.mxu0 0.0
    %634 = vmatprep.subr.mxu0 0.0
    %635 = vmatpush1.msra.mxu0 0.0
    %636 = vmatprep.subr.mxu0 0.0
    %637 = vmatpush1.msra.mxu0 0.0
    %638 = vmatprep.subr.mxu0 0.0
    %639 = vmatpush1.msra.mxu0 0.0
    %640 = vmatprep.subr.mxu0 0.0
    %641 = vmatpush1.msra.mxu0 0.0
    %642 = vmatprep.subr.mxu0 0.0
    %643 = vmatpush1.msra.mxu0 0.0
    %644 = vmatprep.subr.mxu0 0.0
    %645 = vmatpush1.msra.mxu0 0.0
    %646 = vmatprep.subr.mxu0 0.0
    %647 = vmatpush1.msra.mxu0 0.0
    %648 = vmatprep.subr.mxu0 0.0
    %649 = vmatpush1.msra.mxu0 0.0
    %650 = vmatprep.mubr.f32.mxu0 0.0
    %651 = vmatmul.mubr.f32.gmra.mrb[0].mxu0 %v568
    %v652 = vpop.f32.mrb[0].mxu0
    %v653 = vadd.f32 0.0, %v652
    %v654 = vpop.f32.mrb[0].mxu0
    %655 = vmatprep.mubr.f32.mxu0 0.0
    %656 = vmatmul.mubr.f32.gmra.mrb[0].mxu0 %v569
    %v657 = vpop.f32.mrb[0].mxu0
    %v658 = vadd.f32 0.0, %v657
    %v659 = vpop.f32.mrb[0].mxu0
    %660 = vdwg.mxu0
    %v661 = vadd.f32 %v455, %v653
    %v662 = vadd.f32 %v458, %v658
    %v664 = vlaneseq
    %v665 = vshrl.u32 %v664, 7
    %v666 = vsub.s32 0, %v665
    %v667 = vrot.slane %v96, %v666
    %v669 = vadd.f32 %v661, %v667
    %v670 = vadd.f32 %v662, %v667
    %671 = vst [vmem:[#allocation11] sm:$0xff] %v467
    %672 = vst [vmem:[#allocation11 + $0x18] sm:$0xff] %v468
    %673 = vst [vmem:[#allocation11 + $0x8] sm:$0xff] %v568
    %674 = vst [vmem:[#allocation11 + $0x20] sm:$0xff] %v569
    %675 = vst [vmem:[#allocation11 + $0x10] sm:$0xff] %v669
    %676 = vst [vmem:[#allocation11 + $0x28] sm:$0xff] %v670
    // Predicated region
    $region46: #{tpu_custom_call.1} parent=1 // pred_check
      _
    $region47: #{tpu_custom_call.1} parent=1 // pred_check_branch
      %678 = sbr.rel (0) target = $region49
    $region48: #{tpu_custom_call.1} parent=1 // pred_region
      %s680 = ssub.s32 768, 768
      %681 = vsyncadd [#allocation4], %s680
      %s682 = sshll.u32 [#allocation11], 4
      %s683 = int_to_ptr.vmem [resolvable:$true] %s682
      %688 = dma.vmem_to_hbm [thread:$0]  %s683, 768, %s6, [#allocation4], 384, 384, 24
    $region49: #{tpu_custom_call.1} parent=1 // pred_fallthru
      _
    // Predicated region
    $region50: #{tpu_custom_call.1} parent=1 // pred_check
      _
    $region51: #{tpu_custom_call.1} parent=1 // pred_check_branch
      %690 = sbr.rel (0) target = $region53
    $region52: #{tpu_custom_call.1} parent=1 // pred_region
      %691 = dma.done [#allocation4], 768
    $region53: #{tpu_custom_call.1} parent=1 // pred_fallthru
      _
    %692 = vsyncpa [#allocation3], 1
    %693 = vsyncpa [#allocation6], 1
    %694 = vsyncpa [#allocation9], 1
    %695 = vsyncpa [#allocation4], 1

</llo_original>
